<compile_context>
chip_gen: v5e
topology: v5e:2x2
jax: 0.10.0
libtpu: 0.0.40
codegen_flags: <defaults>
</compile_context>

<pallas_src>
import jax
import jax.numpy as jnp
from jax.experimental import pallas as pl
from jax.experimental.pallas import tpu as pltpu


def _pad8(n):
    return (n + 7) // 8 * 8


# --------------------------- one-time param fusion ---------------------------
def fuse_params(params):
    """Fuse all weights/biases into ONE contiguous f32 slab (init-time only)."""
    A = params["w1"].shape[0]
    E = params["wih_f"].shape[0]
    H = params["w2"].shape[1]
    H6 = 6 * H
    C = max(96, H, H6)

    def interleave(f, b):
        # (*, 3H) gate order [r|z|n] per direction -> (*, 6H) [r_f r_b z_f z_b n_f n_b]
        return jnp.concatenate([f[:, :H], b[:, :H],
                                f[:, H:2 * H], b[:, H:2 * H],
                                f[:, 2 * H:], b[:, 2 * H:]], axis=1)

    wih = interleave(params["wih_f"], params["wih_b"])           # (E, 6H)
    bih = interleave(params["bih_f"], params["bih_b"])           # (1, 6H)
    bhh = interleave(params["bhh_f"], params["bhh_b"])           # (1, 6H)

    # Block-structured recurrent weight: rows 0:H (fwd state) feed only *_f
    # columns, rows H:2H (bwd state) feed only *_b columns.
    # NOTE: keep this single merged matmul only while 2H <= MXU contraction
    # dim (128 on v5e, 256 on v6e/v7x); past that split back into two pushes.
    zz = jnp.zeros((H, H), jnp.float32)
    wf, wb = params["whh_f"], params["whh_b"]
    whh = jnp.concatenate([
        jnp.concatenate([wf[:, :H], zz, wf[:, H:2 * H], zz, wf[:, 2 * H:], zz], axis=1),
        jnp.concatenate([zz, wb[:, :H], zz, wb[:, H:2 * H], zz, wb[:, 2 * H:]], axis=1),
    ], axis=0)                                                    # (2H, 6H)

    sections = [params["w1"], params["w2"], wih, whh]
    offs, rows = [], 0
    for s in sections:
        offs.append(rows)
        rows += _pad8(s.shape[0])                 # each section 8-row aligned
    o_b = rows                                    # 4 bias rows at the end
    rows += 8
    slab = jnp.zeros((rows, C), jnp.float32)
    for o, s in zip(offs, sections):
        slab = slab.at[o:o + s.shape[0], :s.shape[1]].set(s)
    slab = slab.at[o_b + 0, :96].set(params["b1"][0])
    slab = slab.at[o_b + 1, :H].set(params["b2"][0])
    slab = slab.at[o_b + 2, :H6].set(bih[0])
    slab = slab.at[o_b + 3, :H6].set(bhh[0])
    meta = (A, E, H, offs[0], offs[1], offs[2], offs[3], o_b)
    return slab, meta


# --------------------------- fused encoder kernel ----------------------------
def make_encoder_kernel(T, B, A, E, H, o_w1, o_w2, o_wih, o_whh, o_b):
    H2, H4, H6 = 2 * H, 4 * H, 6 * H

    def kernel(ann_ref, x_ref, slab_ref, out_ref, hN_ref, gi_ref, f_ref, b_ref):
        # ---- unpack fused weights from the single slab (static ref slices) --
        w1 = slab_ref[o_w1:o_w1 + A, :96]
        w2 = slab_ref[o_w2:o_w2 + 96, :H]
        wih = slab_ref[o_wih:o_wih + E, :H6]
        whh = slab_ref[o_whh:o_whh + H2, :H6]
        b1 = slab_ref[o_b + 0:o_b + 1, :96]
        b2 = slab_ref[o_b + 1:o_b + 2, :H]
        bih = slab_ref[o_b + 2:o_b + 3, :H6]
        bhh = slab_ref[o_b + 3:o_b + 4, :H6]

        # ---- MLP prologue: ann -> h0, shared by both directions -------------
        h = jnp.maximum(jnp.dot(ann_ref[...], w1,
                                preferred_element_type=jnp.float32) + b1, 0.0)
        h0 = jnp.dot(h, w2, preferred_element_type=jnp.float32) + b2     # (B, H)
        h_cat = jnp.concatenate([h0, h0], axis=-1)                       # (B, 2H)

        # ---- hoisted input-gate matmul: all timesteps, both directions ------
        # gi layout per row-block t: [r_f r_b z_f z_b n_f n_b] at time t.
        gi_ref[...] = (jnp.dot(x_ref[...], wih,
                               preferred_element_type=jnp.float32) + bih)

        # Hoisted column mask: True on forward-direction columns.
        col = jax.lax.broadcasted_iota(jnp.int32, (B, H6), 1)
        fwd_mask = (col % H2) < H

        # T is small & static -> fully unrolled; the only per-step serial work
        # is one (B,2H)x(2H,6H) MXU push, 1 sigmoid, 1 tanh and a few VPU ops.
        for s in range(T):
            gi_s = gi_ref[s * B:(s + 1) * B, :]              # time s
            gi_r = gi_ref[(T - 1 - s) * B:(T - s) * B, :]    # time T-1-s
            gi = jnp.where(fwd_mask, gi_s, gi_r)             # fwd@s, bwd@T-1-s

            gh = jnp.dot(h_cat, whh, preferred_element_type=jnp.float32) + bhh
            rz = jax.nn.sigmoid(gi[:, :H4] + gh[:, :H4])
            r, z = rz[:, :H2], rz[:, H2:]
            n = jnp.tanh(gi[:, H4:] + r * gh[:, H4:])
            h_cat = n + z * (h_cat - n)                      # (1-z)*n + z*h

            f_ref[s * B:(s + 1) * B, :] = h_cat[:, :H]           # fwd out @ s
            b_ref[(T - 1 - s) * B:(T - s) * B, :] = h_cat[:, H:]  # bwd out @ T-1-s

        # ---- single dense output write + final hidden state -----------------
        out_ref[...] = f_ref[...] + b_ref[...]
        hN_ref[0] = h_cat[:, :H]
        hN_ref[1] = h_cat[:, H:]

    return kernel


# ------------------------------ forward wrapper -------------------------------
def build_encoder_forward(meta):
    A, E, H, o_w1, o_w2, o_wih, o_whh, o_b = meta

    @jax.jit
    def forward(ann_data, encoder_data, slab):
        T, B, _ = encoder_data.shape
        x2d = encoder_data.reshape(T * B, E)          # free row-major reshape
        kernel = make_encoder_kernel(T, B, A, E, H, o_w1, o_w2, o_wih, o_whh, o_b)
        out2d, hN = pl.pallas_call(
            kernel,
            out_shape=(jax.ShapeDtypeStruct((T * B, H), jnp.float32),
                       jax.ShapeDtypeStruct((2, B, H), jnp.float32)),
            scratch_shapes=[pltpu.VMEM((T * B, 6 * H), jnp.float32),  # gi
                            pltpu.VMEM((T * B, H), jnp.float32),      # fwd out
                            pltpu.VMEM((T * B, H), jnp.float32)],     # bwd out
        )(ann_data, x2d, slab)
        return out2d.reshape(T, B, H), hN

    return forward


# ------------------------------- param init -----------------------------------
def init_params(key, ann_input_size, enc_input_size, hidden_size):
    A, E, H = ann_input_size, enc_input_size, hidden_size
    ks = jax.random.split(key, 12)

    def u(k, shape, fan):
        s = 1.0 / jnp.sqrt(fan)
        return jax.random.uniform(k, shape, jnp.float32, -s, s)

    return {
        # MLP: Linear(A, 96) -> ReLU -> Linear(96, H); stored transposed.
        "w1": u(ks[0], (A, 96), A), "b1": u(ks[1], (1, 96), A),
        "w2": u(ks[2], (96, H), 96), "b2": u(ks[3], (1, H), 96),
        # GRU forward direction (gate order r|z|n on last dim).
        "wih_f": u(ks[4], (E, 3 * H), H), "whh_f": u(ks[5], (H, 3 * H), H),
        "bih_f": u(ks[6], (1, 3 * H), H), "bhh_f": u(ks[7], (1, 3 * H), H),
        # GRU backward direction.
        "wih_b": u(ks[8], (E, 3 * H), H), "whh_b": u(ks[9], (H, 3 * H), H),
        "bih_b": u(ks[10], (1, 3 * H), H), "bhh_b": u(ks[11], (1, 3 * H), H),
    }


# --------------------------- pure-JAX reference -------------------------------
def reference_forward(ann, x, p):
    H = p["w2"].shape[1]
    T = x.shape[0]
    h = jnp.maximum(ann @ p["w1"] + p["b1"], 0.0)
    h0 = h @ p["w2"] + p["b2"]

    def step(hp, xt, wih, whh, bih, bhh):
        gi = xt @ wih + bih
        gh = hp @ whh + bhh
        r = jax.nn.sigmoid(gi[:, :H] + gh[:, :H])
        z = jax.nn.sigmoid(gi[:, H:2 * H] + gh[:, H:2 * H])
        n = jnp.tanh(gi[:, 2 * H:] + r * gh[:, 2 * H:])
        return (1.0 - z) * n + z * hp

    hf, hb = h0, h0
    outs_f, outs_b = [], [None] * T
    for t in range(T):
        hf = step(hf, x[t], p["wih_f"], p["whh_f"], p["bih_f"], p["bhh_f"])
        outs_f.append(hf)
        tb = T - 1 - t
        hb = step(hb, x[tb], p["wih_b"], p["whh_b"], p["bih_b"], p["bhh_b"])
        outs_b[tb] = hb
    return jnp.stack(outs_f) + jnp.stack(outs_b), jnp.stack([hf, hb])


if __name__ == "__main__":
    ANN_IN, ENC_IN, HIDDEN = 8, 16, 32
    B, T = 2, 8

    key = jax.random.PRNGKey(0)
    kp, ka, ke = jax.random.split(key, 3)
    params = init_params(kp, ANN_IN, ENC_IN, HIDDEN)
    slab, meta = fuse_params(params)                 # once, at init time
    encoder_forward = build_encoder_forward(meta)

    ann_data = jax.random.normal(ka, (B, ANN_IN), jnp.float32)
    encoder_data = jax.random.normal(ke, (T, B, ENC_IN), jnp.float32)

    outputs, hidden = encoder_forward(ann_data, encoder_data, slab)
    jax.block_until_ready((outputs, hidden))

    assert outputs.shape == (T, B, HIDDEN)
    assert hidden.shape == (2, B, HIDDEN)

    ref_out, ref_hN = reference_forward(ann_data, encoder_data, params)
    assert jnp.allclose(outputs, ref_out, atol=1e-4, rtol=1e-4)
    assert jnp.allclose(hidden, ref_hN, atol=1e-4, rtol=1e-4)

    print("KERNEL_OK")
</pallas_src>

<mosaic_0001>
module attributes {stable_mosaic.version = 11 : i64} {
  func.func @kernel(%arg0: memref<2x8xf32, #tpu.memory_space<vmem>>, %arg1: memref<16x16xf32, #tpu.memory_space<vmem>>, %arg2: memref<192x192xf32, #tpu.memory_space<vmem>>, %arg3: memref<16x32xf32, #tpu.memory_space<vmem>>, %arg4: memref<2x2x32xf32, #tpu.memory_space<vmem>>, %arg5: memref<16x192xf32, #tpu.memory_space<vmem>>, %arg6: memref<16x32xf32, #tpu.memory_space<vmem>>, %arg7: memref<16x32xf32, #tpu.memory_space<vmem>>) attributes {dimension_semantics = [], scalar_prefetch = 0 : i64, scratch_operands = 3 : i64, tpu.core_type = #tpu.core_type<tc>} {
    %c0 = arith.constant 0 : index
    %c0_0 = arith.constant 0 : index
    %0 = vector.load %arg2[%c0, %c0_0] : memref<192x192xf32, #tpu.memory_space<vmem>>, vector<8x96xf32>
    %c8 = arith.constant 8 : index
    %c0_1 = arith.constant 0 : index
    %1 = vector.load %arg2[%c8, %c0_1] : memref<192x192xf32, #tpu.memory_space<vmem>>, vector<96x32xf32>
    %c104 = arith.constant 104 : index
    %c0_2 = arith.constant 0 : index
    %2 = vector.load %arg2[%c104, %c0_2] : memref<192x192xf32, #tpu.memory_space<vmem>>, vector<16x192xf32>
    %c120 = arith.constant 120 : index
    %c0_3 = arith.constant 0 : index
    %3 = vector.load %arg2[%c120, %c0_3] : memref<192x192xf32, #tpu.memory_space<vmem>>, vector<64x192xf32>
    %c184 = arith.constant 184 : index
    %c0_4 = arith.constant 0 : index
    %4 = vector.load %arg2[%c184, %c0_4] : memref<192x192xf32, #tpu.memory_space<vmem>>, vector<1x96xf32>
    %c185 = arith.constant 185 : index
    %c0_5 = arith.constant 0 : index
    %5 = vector.load %arg2[%c185, %c0_5] : memref<192x192xf32, #tpu.memory_space<vmem>>, vector<1x32xf32>
    %c186 = arith.constant 186 : index
    %c0_6 = arith.constant 0 : index
    %6 = vector.load %arg2[%c186, %c0_6] : memref<192x192xf32, #tpu.memory_space<vmem>>, vector<1x192xf32>
    %c187 = arith.constant 187 : index
    %c0_7 = arith.constant 0 : index
    %7 = vector.load %arg2[%c187, %c0_7] : memref<192x192xf32, #tpu.memory_space<vmem>>, vector<1x192xf32>
    %c0_8 = arith.constant 0 : index
    %c0_9 = arith.constant 0 : index
    %8 = vector.load %arg0[%c0_8, %c0_9] : memref<2x8xf32, #tpu.memory_space<vmem>>, vector<2x8xf32>
    %cst = arith.constant dense<0.000000e+00> : vector<2x96xf32>
    %9 = tpu.matmul %8, %0, %cst {dimension_numbers = #tpu.dot_dimension_numbers<[1], [0], [0], [1], [0, 0, 1, 1], [], []>} : vector<2x8xf32>, vector<8x96xf32>, vector<2x96xf32> -> vector<2x96xf32>
    %10 = vector.broadcast %4 : vector<1x96xf32> to vector<2x96xf32>
    %11 = arith.addf %9, %10 : vector<2x96xf32>
    %cst_10 = arith.constant 0.000000e+00 : f32
    %12 = vector.broadcast %cst_10 : f32 to vector<2x96xf32>
    %13 = arith.maximumf %11, %12 : vector<2x96xf32>
    %cst_11 = arith.constant dense<0.000000e+00> : vector<2x32xf32>
    %14 = tpu.matmul %13, %1, %cst_11 {dimension_numbers = #tpu.dot_dimension_numbers<[1], [0], [0], [1], [0, 0, 1, 1], [], []>} : vector<2x96xf32>, vector<96x32xf32>, vector<2x32xf32> -> vector<2x32xf32>
    %15 = vector.broadcast %5 : vector<1x32xf32> to vector<2x32xf32>
    %16 = arith.addf %14, %15 : vector<2x32xf32>
    %17 = tpu.concatenate %16, %16 in 1 : vector<2x32xf32>, vector<2x32xf32> -> vector<2x64xf32>
    %c0_12 = arith.constant 0 : index
    %c0_13 = arith.constant 0 : index
    %18 = vector.load %arg1[%c0_12, %c0_13] : memref<16x16xf32, #tpu.memory_space<vmem>>, vector<16x16xf32>
    %cst_14 = arith.constant dense<0.000000e+00> : vector<16x192xf32>
    %19 = tpu.matmul %18, %2, %cst_14 {dimension_numbers = #tpu.dot_dimension_numbers<[1], [0], [0], [1], [0, 0, 1, 1], [], []>} : vector<16x16xf32>, vector<16x192xf32>, vector<16x192xf32> -> vector<16x192xf32>
    %20 = vector.broadcast %6 : vector<1x192xf32> to vector<16x192xf32>
    %21 = arith.addf %19, %20 : vector<16x192xf32>
    %c0_15 = arith.constant 0 : index
    %c0_16 = arith.constant 0 : index
    %22 = vector.load %arg5[%c0_15, %c0_16] : memref<16x192xf32, #tpu.memory_space<vmem>>, vector<16x192xf32>
    tpu.vector_store %arg5[%c0_15, %c0_16], %21 {strides = array<i32>} : memref<16x192xf32, #tpu.memory_space<vmem>>, vector<16x192xf32>,
    %23 = tpu.iota {dimensions = array<i32: 1>} : vector<2x192xi32>
    %c64_i32 = arith.constant 64 : i32
    %c0_i32 = arith.constant 0 : i32
    %24 = arith.cmpi eq, %c64_i32, %c0_i32 : i32
    %c1_i32 = arith.constant 1 : i32
    %25 = arith.select %24, %c1_i32, %c64_i32 : i32
    %26 = vector.broadcast %25 : i32 to vector<2x192xi32>
    %27 = arith.remsi %23, %26 : vector<2x192xi32>
    %c0_i32_17 = arith.constant 0 : i32
    %28 = vector.broadcast %c0_i32_17 : i32 to vector<2x192xi32>
    %29 = arith.cmpi ne, %27, %28 : vector<2x192xi32>
    %c0_i32_18 = arith.constant 0 : i32
    %30 = vector.broadcast %c0_i32_18 : i32 to vector<2x192xi32>
    %31 = arith.cmpi slt, %27, %30 : vector<2x192xi32>
    %c0_i32_19 = arith.constant 0 : i32
    %32 = arith.cmpi slt, %25, %c0_i32_19 : i32
    %33 = vector.broadcast %32 : i1 to vector<2x192xi1>
    %34 = vector.broadcast %33 : vector<2x192xi1> to vector<2x192xi1>
    %35 = arith.xori %31, %34 : vector<2x192xi1>
    %36 = arith.andi %35, %29 : vector<2x192xi1>
    %37 = vector.broadcast %25 : i32 to vector<2x192xi32>
    %38 = arith.addi %27, %37 : vector<2x192xi32>
    %39 = arith.select %36, %38, %27 : vector<2x192xi1>, vector<2x192xi32>
    %c32_i32 = arith.constant 32 : i32
    %40 = vector.broadcast %c32_i32 : i32 to vector<2x192xi32>
    %41 = arith.cmpi slt, %39, %40 : vector<2x192xi32>
    %c0_20 = arith.constant 0 : index
    %c0_21 = arith.constant 0 : index
    %42 = vector.load %arg5[%c0_20, %c0_21] : memref<16x192xf32, #tpu.memory_space<vmem>>, vector<2x192xf32>
    %c14 = arith.constant 14 : index
    %c0_22 = arith.constant 0 : index
    %43 = vector.load %arg5[%c14, %c0_22] : memref<16x192xf32, #tpu.memory_space<vmem>>, vector<2x192xf32>
    %44 = arith.select %41, %42, %43 : vector<2x192xi1>, vector<2x192xf32>
    %cst_23 = arith.constant dense<0.000000e+00> : vector<2x192xf32>
    %45 = tpu.matmul %17, %3, %cst_23 {dimension_numbers = #tpu.dot_dimension_numbers<[1], [0], [0], [1], [0, 0, 1, 1], [], []>} : vector<2x64xf32>, vector<64x192xf32>, vector<2x192xf32> -> vector<2x192xf32>
    %46 = vector.broadcast %7 : vector<1x192xf32> to vector<2x192xf32>
    %47 = arith.addf %45, %46 : vector<2x192xf32>
    %48 = vector.extract_strided_slice %44 {offsets = [0, 0], sizes = [2, 128], strides = [1, 1]} : vector<2x192xf32> to vector<2x128xf32>
    %49 = vector.extract_strided_slice %47 {offsets = [0, 0], sizes = [2, 128], strides = [1, 1]} : vector<2x192xf32> to vector<2x128xf32>
    %50 = arith.addf %48, %49 : vector<2x128xf32>
    %51 = arith.negf %50 : vector<2x128xf32>
    %52 = math.exp %51 : vector<2x128xf32>
    %cst_24 = arith.constant 1.000000e+00 : f32
    %53 = vector.broadcast %cst_24 : f32 to vector<2x128xf32>
    %54 = arith.addf %53, %52 : vector<2x128xf32>
    %55 = arith.divf %53, %54 : vector<2x128xf32>
    %56 = vector.extract_strided_slice %55 {offsets = [0, 0], sizes = [2, 64], strides = [1, 1]} : vector<2x128xf32> to vector<2x64xf32>
    %57 = vector.extract_strided_slice %55 {offsets = [0, 64], sizes = [2, 64], strides = [1, 1]} : vector<2x128xf32> to vector<2x64xf32>
    %58 = vector.extract_strided_slice %44 {offsets = [0, 128], sizes = [2, 64], strides = [1, 1]} : vector<2x192xf32> to vector<2x64xf32>
    %59 = vector.extract_strided_slice %47 {offsets = [0, 128], sizes = [2, 64], strides = [1, 1]} : vector<2x192xf32> to vector<2x64xf32>
    %60 = arith.mulf %56, %59 : vector<2x64xf32>
    %61 = arith.addf %58, %60 : vector<2x64xf32>
    %62 = math.tanh %61 : vector<2x64xf32>
    %63 = arith.subf %17, %62 : vector<2x64xf32>
    %64 = arith.mulf %57, %63 : vector<2x64xf32>
    %65 = arith.addf %62, %64 : vector<2x64xf32>
    %66 = vector.extract_strided_slice %65 {offsets = [0, 0], sizes = [2, 32], strides = [1, 1]} : vector<2x64xf32> to vector<2x32xf32>
    %c0_25 = arith.constant 0 : index
    %c0_26 = arith.constant 0 : index
    %67 = vector.load %arg6[%c0_25, %c0_26] : memref<16x32xf32, #tpu.memory_space<vmem>>, vector<2x32xf32>
    tpu.vector_store %arg6[%c0_25, %c0_26], %66 {strides = array<i32>} : memref<16x32xf32, #tpu.memory_space<vmem>>, vector<2x32xf32>,
    %68 = vector.extract_strided_slice %65 {offsets = [0, 32], sizes = [2, 32], strides = [1, 1]} : vector<2x64xf32> to vector<2x32xf32>
    %c14_27 = arith.constant 14 : index
    %c0_28 = arith.constant 0 : index
    %69 = vector.load %arg7[%c14_27, %c0_28] : memref<16x32xf32, #tpu.memory_space<vmem>>, vector<2x32xf32>
    tpu.vector_store %arg7[%c14_27, %c0_28], %68 {strides = array<i32>} : memref<16x32xf32, #tpu.memory_space<vmem>>, vector<2x32xf32>,
    %c2 = arith.constant 2 : index
    %c0_29 = arith.constant 0 : index
    %70 = vector.load %arg5[%c2, %c0_29] : memref<16x192xf32, #tpu.memory_space<vmem>>, vector<2x192xf32>
    %c12 = arith.constant 12 : index
    %c0_30 = arith.constant 0 : index
    %71 = vector.load %arg5[%c12, %c0_30] : memref<16x192xf32, #tpu.memory_space<vmem>>, vector<2x192xf32>
    %72 = arith.select %41, %70, %71 : vector<2x192xi1>, vector<2x192xf32>
    %cst_31 = arith.constant dense<0.000000e+00> : vector<2x192xf32>
    %73 = tpu.matmul %65, %3, %cst_31 {dimension_numbers = #tpu.dot_dimension_numbers<[1], [0], [0], [1], [0, 0, 1, 1], [], []>} : vector<2x64xf32>, vector<64x192xf32>, vector<2x192xf32> -> vector<2x192xf32>
    %74 = vector.broadcast %7 : vector<1x192xf32> to vector<2x192xf32>
    %75 = arith.addf %73, %74 : vector<2x192xf32>
    %76 = vector.extract_strided_slice %72 {offsets = [0, 0], sizes = [2, 128], strides = [1, 1]} : vector<2x192xf32> to vector<2x128xf32>
    %77 = vector.extract_strided_slice %75 {offsets = [0, 0], sizes = [2, 128], strides = [1, 1]} : vector<2x192xf32> to vector<2x128xf32>
    %78 = arith.addf %76, %77 : vector<2x128xf32>
    %79 = arith.negf %78 : vector<2x128xf32>
    %80 = math.exp %79 : vector<2x128xf32>
    %cst_32 = arith.constant 1.000000e+00 : f32
    %81 = vector.broadcast %cst_32 : f32 to vector<2x128xf32>
    %82 = arith.addf %81, %80 : vector<2x128xf32>
    %83 = arith.divf %81, %82 : vector<2x128xf32>
    %84 = vector.extract_strided_slice %83 {offsets = [0, 0], sizes = [2, 64], strides = [1, 1]} : vector<2x128xf32> to vector<2x64xf32>
    %85 = vector.extract_strided_slice %83 {offsets = [0, 64], sizes = [2, 64], strides = [1, 1]} : vector<2x128xf32> to vector<2x64xf32>
    %86 = vector.extract_strided_slice %72 {offsets = [0, 128], sizes = [2, 64], strides = [1, 1]} : vector<2x192xf32> to vector<2x64xf32>
    %87 = vector.extract_strided_slice %75 {offsets = [0, 128], sizes = [2, 64], strides = [1, 1]} : vector<2x192xf32> to vector<2x64xf32>
    %88 = arith.mulf %84, %87 : vector<2x64xf32>
    %89 = arith.addf %86, %88 : vector<2x64xf32>
    %90 = math.tanh %89 : vector<2x64xf32>
    %91 = arith.subf %65, %90 : vector<2x64xf32>
    %92 = arith.mulf %85, %91 : vector<2x64xf32>
    %93 = arith.addf %90, %92 : vector<2x64xf32>
    %94 = vector.extract_strided_slice %93 {offsets = [0, 0], sizes = [2, 32], strides = [1, 1]} : vector<2x64xf32> to vector<2x32xf32>
    %c2_33 = arith.constant 2 : index
    %c0_34 = arith.constant 0 : index
    %95 = vector.load %arg6[%c2_33, %c0_34] : memref<16x32xf32, #tpu.memory_space<vmem>>, vector<2x32xf32>
    tpu.vector_store %arg6[%c2_33, %c0_34], %94 {strides = array<i32>} : memref<16x32xf32, #tpu.memory_space<vmem>>, vector<2x32xf32>,
    %96 = vector.extract_strided_slice %93 {offsets = [0, 32], sizes = [2, 32], strides = [1, 1]} : vector<2x64xf32> to vector<2x32xf32>
    %c12_35 = arith.constant 12 : index
    %c0_36 = arith.constant 0 : index
    %97 = vector.load %arg7[%c12_35, %c0_36] : memref<16x32xf32, #tpu.memory_space<vmem>>, vector<2x32xf32>
    tpu.vector_store %arg7[%c12_35, %c0_36], %96 {strides = array<i32>} : memref<16x32xf32, #tpu.memory_space<vmem>>, vector<2x32xf32>,
    %c4 = arith.constant 4 : index
    %c0_37 = arith.constant 0 : index
    %98 = vector.load %arg5[%c4, %c0_37] : memref<16x192xf32, #tpu.memory_space<vmem>>, vector<2x192xf32>
    %c10 = arith.constant 10 : index
    %c0_38 = arith.constant 0 : index
    %99 = vector.load %arg5[%c10, %c0_38] : memref<16x192xf32, #tpu.memory_space<vmem>>, vector<2x192xf32>
    %100 = arith.select %41, %98, %99 : vector<2x192xi1>, vector<2x192xf32>
    %cst_39 = arith.constant dense<0.000000e+00> : vector<2x192xf32>
    %101 = tpu.matmul %93, %3, %cst_39 {dimension_numbers = #tpu.dot_dimension_numbers<[1], [0], [0], [1], [0, 0, 1, 1], [], []>} : vector<2x64xf32>, vector<64x192xf32>, vector<2x192xf32> -> vector<2x192xf32>
    %102 = vector.broadcast %7 : vector<1x192xf32> to vector<2x192xf32>
    %103 = arith.addf %101, %102 : vector<2x192xf32>
    %104 = vector.extract_strided_slice %100 {offsets = [0, 0], sizes = [2, 128], strides = [1, 1]} : vector<2x192xf32> to vector<2x128xf32>
    %105 = vector.extract_strided_slice %103 {offsets = [0, 0], sizes = [2, 128], strides = [1, 1]} : vector<2x192xf32> to vector<2x128xf32>
    %106 = arith.addf %104, %105 : vector<2x128xf32>
    %107 = arith.negf %106 : vector<2x128xf32>
    %108 = math.exp %107 : vector<2x128xf32>
    %cst_40 = arith.constant 1.000000e+00 : f32
    %109 = vector.broadcast %cst_40 : f32 to vector<2x128xf32>
    %110 = arith.addf %109, %108 : vector<2x128xf32>
    %111 = arith.divf %109, %110 : vector<2x128xf32>
    %112 = vector.extract_strided_slice %111 {offsets = [0, 0], sizes = [2, 64], strides = [1, 1]} : vector<2x128xf32> to vector<2x64xf32>
    %113 = vector.extract_strided_slice %111 {offsets = [0, 64], sizes = [2, 64], strides = [1, 1]} : vector<2x128xf32> to vector<2x64xf32>
    %114 = vector.extract_strided_slice %100 {offsets = [0, 128], sizes = [2, 64], strides = [1, 1]} : vector<2x192xf32> to vector<2x64xf32>
    %115 = vector.extract_strided_slice %103 {offsets = [0, 128], sizes = [2, 64], strides = [1, 1]} : vector<2x192xf32> to vector<2x64xf32>
    %116 = arith.mulf %112, %115 : vector<2x64xf32>
    %117 = arith.addf %114, %116 : vector<2x64xf32>
    %118 = math.tanh %117 : vector<2x64xf32>
    %119 = arith.subf %93, %118 : vector<2x64xf32>
    %120 = arith.mulf %113, %119 : vector<2x64xf32>
    %121 = arith.addf %118, %120 : vector<2x64xf32>
    %122 = vector.extract_strided_slice %121 {offsets = [0, 0], sizes = [2, 32], strides = [1, 1]} : vector<2x64xf32> to vector<2x32xf32>
    %c4_41 = arith.constant 4 : index
    %c0_42 = arith.constant 0 : index
    %123 = vector.load %arg6[%c4_41, %c0_42] : memref<16x32xf32, #tpu.memory_space<vmem>>, vector<2x32xf32>
    tpu.vector_store %arg6[%c4_41, %c0_42], %122 {strides = array<i32>} : memref<16x32xf32, #tpu.memory_space<vmem>>, vector<2x32xf32>,
    %124 = vector.extract_strided_slice %121 {offsets = [0, 32], sizes = [2, 32], strides = [1, 1]} : vector<2x64xf32> to vector<2x32xf32>
    %c10_43 = arith.constant 10 : index
    %c0_44 = arith.constant 0 : index
    %125 = vector.load %arg7[%c10_43, %c0_44] : memref<16x32xf32, #tpu.memory_space<vmem>>, vector<2x32xf32>
    tpu.vector_store %arg7[%c10_43, %c0_44], %124 {strides = array<i32>} : memref<16x32xf32, #tpu.memory_space<vmem>>, vector<2x32xf32>,
    %c6 = arith.constant 6 : index
    %c0_45 = arith.constant 0 : index
    %126 = vector.load %arg5[%c6, %c0_45] : memref<16x192xf32, #tpu.memory_space<vmem>>, vector<2x192xf32>
    %c8_46 = arith.constant 8 : index
    %c0_47 = arith.constant 0 : index
    %127 = vector.load %arg5[%c8_46, %c0_47] : memref<16x192xf32, #tpu.memory_space<vmem>>, vector<2x192xf32>
    %128 = arith.select %41, %126, %127 : vector<2x192xi1>, vector<2x192xf32>
    %cst_48 = arith.constant dense<0.000000e+00> : vector<2x192xf32>
    %129 = tpu.matmul %121, %3, %cst_48 {dimension_numbers = #tpu.dot_dimension_numbers<[1], [0], [0], [1], [0, 0, 1, 1], [], []>} : vector<2x64xf32>, vector<64x192xf32>, vector<2x192xf32> -> vector<2x192xf32>
    %130 = vector.broadcast %7 : vector<1x192xf32> to vector<2x192xf32>
    %131 = arith.addf %129, %130 : vector<2x192xf32>
    %132 = vector.extract_strided_slice %128 {offsets = [0, 0], sizes = [2, 128], strides = [1, 1]} : vector<2x192xf32> to vector<2x128xf32>
    %133 = vector.extract_strided_slice %131 {offsets = [0, 0], sizes = [2, 128], strides = [1, 1]} : vector<2x192xf32> to vector<2x128xf32>
    %134 = arith.addf %132, %133 : vector<2x128xf32>
    %135 = arith.negf %134 : vector<2x128xf32>
    %136 = math.exp %135 : vector<2x128xf32>
    %cst_49 = arith.constant 1.000000e+00 : f32
    %137 = vector.broadcast %cst_49 : f32 to vector<2x128xf32>
    %138 = arith.addf %137, %136 : vector<2x128xf32>
    %139 = arith.divf %137, %138 : vector<2x128xf32>
    %140 = vector.extract_strided_slice %139 {offsets = [0, 0], sizes = [2, 64], strides = [1, 1]} : vector<2x128xf32> to vector<2x64xf32>
    %141 = vector.extract_strided_slice %139 {offsets = [0, 64], sizes = [2, 64], strides = [1, 1]} : vector<2x128xf32> to vector<2x64xf32>
    %142 = vector.extract_strided_slice %128 {offsets = [0, 128], sizes = [2, 64], strides = [1, 1]} : vector<2x192xf32> to vector<2x64xf32>
    %143 = vector.extract_strided_slice %131 {offsets = [0, 128], sizes = [2, 64], strides = [1, 1]} : vector<2x192xf32> to vector<2x64xf32>
    %144 = arith.mulf %140, %143 : vector<2x64xf32>
    %145 = arith.addf %142, %144 : vector<2x64xf32>
    %146 = math.tanh %145 : vector<2x64xf32>
    %147 = arith.subf %121, %146 : vector<2x64xf32>
    %148 = arith.mulf %141, %147 : vector<2x64xf32>
    %149 = arith.addf %146, %148 : vector<2x64xf32>
    %150 = vector.extract_strided_slice %149 {offsets = [0, 0], sizes = [2, 32], strides = [1, 1]} : vector<2x64xf32> to vector<2x32xf32>
    %c6_50 = arith.constant 6 : index
    %c0_51 = arith.constant 0 : index
    %151 = vector.load %arg6[%c6_50, %c0_51] : memref<16x32xf32, #tpu.memory_space<vmem>>, vector<2x32xf32>
    tpu.vector_store %arg6[%c6_50, %c0_51], %150 {strides = array<i32>} : memref<16x32xf32, #tpu.memory_space<vmem>>, vector<2x32xf32>,
    %152 = vector.extract_strided_slice %149 {offsets = [0, 32], sizes = [2, 32], strides = [1, 1]} : vector<2x64xf32> to vector<2x32xf32>
    %c8_52 = arith.constant 8 : index
    %c0_53 = arith.constant 0 : index
    %153 = vector.load %arg7[%c8_52, %c0_53] : memref<16x32xf32, #tpu.memory_space<vmem>>, vector<2x32xf32>
    tpu.vector_store %arg7[%c8_52, %c0_53], %152 {strides = array<i32>} : memref<16x32xf32, #tpu.memory_space<vmem>>, vector<2x32xf32>,
    %c8_54 = arith.constant 8 : index
    %c0_55 = arith.constant 0 : index
    %154 = vector.load %arg5[%c8_54, %c0_55] : memref<16x192xf32, #tpu.memory_space<vmem>>, vector<2x192xf32>
    %c6_56 = arith.constant 6 : index
    %c0_57 = arith.constant 0 : index
    %155 = vector.load %arg5[%c6_56, %c0_57] : memref<16x192xf32, #tpu.memory_space<vmem>>, vector<2x192xf32>
    %156 = arith.select %41, %154, %155 : vector<2x192xi1>, vector<2x192xf32>
    %cst_58 = arith.constant dense<0.000000e+00> : vector<2x192xf32>
    %157 = tpu.matmul %149, %3, %cst_58 {dimension_numbers = #tpu.dot_dimension_numbers<[1], [0], [0], [1], [0, 0, 1, 1], [], []>} : vector<2x64xf32>, vector<64x192xf32>, vector<2x192xf32> -> vector<2x192xf32>
    %158 = vector.broadcast %7 : vector<1x192xf32> to vector<2x192xf32>
    %159 = arith.addf %157, %158 : vector<2x192xf32>
    %160 = vector.extract_strided_slice %156 {offsets = [0, 0], sizes = [2, 128], strides = [1, 1]} : vector<2x192xf32> to vector<2x128xf32>
    %161 = vector.extract_strided_slice %159 {offsets = [0, 0], sizes = [2, 128], strides = [1, 1]} : vector<2x192xf32> to vector<2x128xf32>
    %162 = arith.addf %160, %161 : vector<2x128xf32>
    %163 = arith.negf %162 : vector<2x128xf32>
    %164 = math.exp %163 : vector<2x128xf32>
    %cst_59 = arith.constant 1.000000e+00 : f32
    %165 = vector.broadcast %cst_59 : f32 to vector<2x128xf32>
    %166 = arith.addf %165, %164 : vector<2x128xf32>
    %167 = arith.divf %165, %166 : vector<2x128xf32>
    %168 = vector.extract_strided_slice %167 {offsets = [0, 0], sizes = [2, 64], strides = [1, 1]} : vector<2x128xf32> to vector<2x64xf32>
    %169 = vector.extract_strided_slice %167 {offsets = [0, 64], sizes = [2, 64], strides = [1, 1]} : vector<2x128xf32> to vector<2x64xf32>
    %170 = vector.extract_strided_slice %156 {offsets = [0, 128], sizes = [2, 64], strides = [1, 1]} : vector<2x192xf32> to vector<2x64xf32>
    %171 = vector.extract_strided_slice %159 {offsets = [0, 128], sizes = [2, 64], strides = [1, 1]} : vector<2x192xf32> to vector<2x64xf32>
    %172 = arith.mulf %168, %171 : vector<2x64xf32>
    %173 = arith.addf %170, %172 : vector<2x64xf32>
    %174 = math.tanh %173 : vector<2x64xf32>
    %175 = arith.subf %149, %174 : vector<2x64xf32>
    %176 = arith.mulf %169, %175 : vector<2x64xf32>
    %177 = arith.addf %174, %176 : vector<2x64xf32>
    %178 = vector.extract_strided_slice %177 {offsets = [0, 0], sizes = [2, 32], strides = [1, 1]} : vector<2x64xf32> to vector<2x32xf32>
    %c8_60 = arith.constant 8 : index
    %c0_61 = arith.constant 0 : index
    %179 = vector.load %arg6[%c8_60, %c0_61] : memref<16x32xf32, #tpu.memory_space<vmem>>, vector<2x32xf32>
    tpu.vector_store %arg6[%c8_60, %c0_61], %178 {strides = array<i32>} : memref<16x32xf32, #tpu.memory_space<vmem>>, vector<2x32xf32>,
    %180 = vector.extract_strided_slice %177 {offsets = [0, 32], sizes = [2, 32], strides = [1, 1]} : vector<2x64xf32> to vector<2x32xf32>
    %c6_62 = arith.constant 6 : index
    %c0_63 = arith.constant 0 : index
    %181 = vector.load %arg7[%c6_62, %c0_63] : memref<16x32xf32, #tpu.memory_space<vmem>>, vector<2x32xf32>
    tpu.vector_store %arg7[%c6_62, %c0_63], %180 {strides = array<i32>} : memref<16x32xf32, #tpu.memory_space<vmem>>, vector<2x32xf32>,
    %c10_64 = arith.constant 10 : index
    %c0_65 = arith.constant 0 : index
    %182 = vector.load %arg5[%c10_64, %c0_65] : memref<16x192xf32, #tpu.memory_space<vmem>>, vector<2x192xf32>
    %c4_66 = arith.constant 4 : index
    %c0_67 = arith.constant 0 : index
    %183 = vector.load %arg5[%c4_66, %c0_67] : memref<16x192xf32, #tpu.memory_space<vmem>>, vector<2x192xf32>
    %184 = arith.select %41, %182, %183 : vector<2x192xi1>, vector<2x192xf32>
    %cst_68 = arith.constant dense<0.000000e+00> : vector<2x192xf32>
    %185 = tpu.matmul %177, %3, %cst_68 {dimension_numbers = #tpu.dot_dimension_numbers<[1], [0], [0], [1], [0, 0, 1, 1], [], []>} : vector<2x64xf32>, vector<64x192xf32>, vector<2x192xf32> -> vector<2x192xf32>
    %186 = vector.broadcast %7 : vector<1x192xf32> to vector<2x192xf32>
    %187 = arith.addf %185, %186 : vector<2x192xf32>
    %188 = vector.extract_strided_slice %184 {offsets = [0, 0], sizes = [2, 128], strides = [1, 1]} : vector<2x192xf32> to vector<2x128xf32>
    %189 = vector.extract_strided_slice %187 {offsets = [0, 0], sizes = [2, 128], strides = [1, 1]} : vector<2x192xf32> to vector<2x128xf32>
    %190 = arith.addf %188, %189 : vector<2x128xf32>
    %191 = arith.negf %190 : vector<2x128xf32>
    %192 = math.exp %191 : vector<2x128xf32>
    %cst_69 = arith.constant 1.000000e+00 : f32
    %193 = vector.broadcast %cst_69 : f32 to vector<2x128xf32>
    %194 = arith.addf %193, %192 : vector<2x128xf32>
    %195 = arith.divf %193, %194 : vector<2x128xf32>
    %196 = vector.extract_strided_slice %195 {offsets = [0, 0], sizes = [2, 64], strides = [1, 1]} : vector<2x128xf32> to vector<2x64xf32>
    %197 = vector.extract_strided_slice %195 {offsets = [0, 64], sizes = [2, 64], strides = [1, 1]} : vector<2x128xf32> to vector<2x64xf32>
    %198 = vector.extract_strided_slice %184 {offsets = [0, 128], sizes = [2, 64], strides = [1, 1]} : vector<2x192xf32> to vector<2x64xf32>
    %199 = vector.extract_strided_slice %187 {offsets = [0, 128], sizes = [2, 64], strides = [1, 1]} : vector<2x192xf32> to vector<2x64xf32>
    %200 = arith.mulf %196, %199 : vector<2x64xf32>
    %201 = arith.addf %198, %200 : vector<2x64xf32>
    %202 = math.tanh %201 : vector<2x64xf32>
    %203 = arith.subf %177, %202 : vector<2x64xf32>
    %204 = arith.mulf %197, %203 : vector<2x64xf32>
    %205 = arith.addf %202, %204 : vector<2x64xf32>
    %206 = vector.extract_strided_slice %205 {offsets = [0, 0], sizes = [2, 32], strides = [1, 1]} : vector<2x64xf32> to vector<2x32xf32>
    %c10_70 = arith.constant 10 : index
    %c0_71 = arith.constant 0 : index
    %207 = vector.load %arg6[%c10_70, %c0_71] : memref<16x32xf32, #tpu.memory_space<vmem>>, vector<2x32xf32>
    tpu.vector_store %arg6[%c10_70, %c0_71], %206 {strides = array<i32>} : memref<16x32xf32, #tpu.memory_space<vmem>>, vector<2x32xf32>,
    %208 = vector.extract_strided_slice %205 {offsets = [0, 32], sizes = [2, 32], strides = [1, 1]} : vector<2x64xf32> to vector<2x32xf32>
    %c4_72 = arith.constant 4 : index
    %c0_73 = arith.constant 0 : index
    %209 = vector.load %arg7[%c4_72, %c0_73] : memref<16x32xf32, #tpu.memory_space<vmem>>, vector<2x32xf32>
    tpu.vector_store %arg7[%c4_72, %c0_73], %208 {strides = array<i32>} : memref<16x32xf32, #tpu.memory_space<vmem>>, vector<2x32xf32>,
    %c12_74 = arith.constant 12 : index
    %c0_75 = arith.constant 0 : index
    %210 = vector.load %arg5[%c12_74, %c0_75] : memref<16x192xf32, #tpu.memory_space<vmem>>, vector<2x192xf32>
    %c2_76 = arith.constant 2 : index
    %c0_77 = arith.constant 0 : index
    %211 = vector.load %arg5[%c2_76, %c0_77] : memref<16x192xf32, #tpu.memory_space<vmem>>, vector<2x192xf32>
    %212 = arith.select %41, %210, %211 : vector<2x192xi1>, vector<2x192xf32>
    %cst_78 = arith.constant dense<0.000000e+00> : vector<2x192xf32>
    %213 = tpu.matmul %205, %3, %cst_78 {dimension_numbers = #tpu.dot_dimension_numbers<[1], [0], [0], [1], [0, 0, 1, 1], [], []>} : vector<2x64xf32>, vector<64x192xf32>, vector<2x192xf32> -> vector<2x192xf32>
    %214 = vector.broadcast %7 : vector<1x192xf32> to vector<2x192xf32>
    %215 = arith.addf %213, %214 : vector<2x192xf32>
    %216 = vector.extract_strided_slice %212 {offsets = [0, 0], sizes = [2, 128], strides = [1, 1]} : vector<2x192xf32> to vector<2x128xf32>
    %217 = vector.extract_strided_slice %215 {offsets = [0, 0], sizes = [2, 128], strides = [1, 1]} : vector<2x192xf32> to vector<2x128xf32>
    %218 = arith.addf %216, %217 : vector<2x128xf32>
    %219 = arith.negf %218 : vector<2x128xf32>
    %220 = math.exp %219 : vector<2x128xf32>
    %cst_79 = arith.constant 1.000000e+00 : f32
    %221 = vector.broadcast %cst_79 : f32 to vector<2x128xf32>
    %222 = arith.addf %221, %220 : vector<2x128xf32>
    %223 = arith.divf %221, %222 : vector<2x128xf32>
    %224 = vector.extract_strided_slice %223 {offsets = [0, 0], sizes = [2, 64], strides = [1, 1]} : vector<2x128xf32> to vector<2x64xf32>
    %225 = vector.extract_strided_slice %223 {offsets = [0, 64], sizes = [2, 64], strides = [1, 1]} : vector<2x128xf32> to vector<2x64xf32>
    %226 = vector.extract_strided_slice %212 {offsets = [0, 128], sizes = [2, 64], strides = [1, 1]} : vector<2x192xf32> to vector<2x64xf32>
    %227 = vector.extract_strided_slice %215 {offsets = [0, 128], sizes = [2, 64], strides = [1, 1]} : vector<2x192xf32> to vector<2x64xf32>
    %228 = arith.mulf %224, %227 : vector<2x64xf32>
    %229 = arith.addf %226, %228 : vector<2x64xf32>
    %230 = math.tanh %229 : vector<2x64xf32>
    %231 = arith.subf %205, %230 : vector<2x64xf32>
    %232 = arith.mulf %225, %231 : vector<2x64xf32>
    %233 = arith.addf %230, %232 : vector<2x64xf32>
    %234 = vector.extract_strided_slice %233 {offsets = [0, 0], sizes = [2, 32], strides = [1, 1]} : vector<2x64xf32> to vector<2x32xf32>
    %c12_80 = arith.constant 12 : index
    %c0_81 = arith.constant 0 : index
    %235 = vector.load %arg6[%c12_80, %c0_81] : memref<16x32xf32, #tpu.memory_space<vmem>>, vector<2x32xf32>
    tpu.vector_store %arg6[%c12_80, %c0_81], %234 {strides = array<i32>} : memref<16x32xf32, #tpu.memory_space<vmem>>, vector<2x32xf32>,
    %236 = vector.extract_strided_slice %233 {offsets = [0, 32], sizes = [2, 32], strides = [1, 1]} : vector<2x64xf32> to vector<2x32xf32>
    %c2_82 = arith.constant 2 : index
    %c0_83 = arith.constant 0 : index
    %237 = vector.load %arg7[%c2_82, %c0_83] : memref<16x32xf32, #tpu.memory_space<vmem>>, vector<2x32xf32>
    tpu.vector_store %arg7[%c2_82, %c0_83], %236 {strides = array<i32>} : memref<16x32xf32, #tpu.memory_space<vmem>>, vector<2x32xf32>,
    %c14_84 = arith.constant 14 : index
    %c0_85 = arith.constant 0 : index
    %238 = vector.load %arg5[%c14_84, %c0_85] : memref<16x192xf32, #tpu.memory_space<vmem>>, vector<2x192xf32>
    %c0_86 = arith.constant 0 : index
    %c0_87 = arith.constant 0 : index
    %239 = vector.load %arg5[%c0_86, %c0_87] : memref<16x192xf32, #tpu.memory_space<vmem>>, vector<2x192xf32>
    %240 = arith.select %41, %238, %239 : vector<2x192xi1>, vector<2x192xf32>
    %cst_88 = arith.constant dense<0.000000e+00> : vector<2x192xf32>
    %241 = tpu.matmul %233, %3, %cst_88 {dimension_numbers = #tpu.dot_dimension_numbers<[1], [0], [0], [1], [0, 0, 1, 1], [], []>} : vector<2x64xf32>, vector<64x192xf32>, vector<2x192xf32> -> vector<2x192xf32>
    %242 = vector.broadcast %7 : vector<1x192xf32> to vector<2x192xf32>
    %243 = arith.addf %241, %242 : vector<2x192xf32>
    %244 = vector.extract_strided_slice %240 {offsets = [0, 0], sizes = [2, 128], strides = [1, 1]} : vector<2x192xf32> to vector<2x128xf32>
    %245 = vector.extract_strided_slice %243 {offsets = [0, 0], sizes = [2, 128], strides = [1, 1]} : vector<2x192xf32> to vector<2x128xf32>
    %246 = arith.addf %244, %245 : vector<2x128xf32>
    %247 = arith.negf %246 : vector<2x128xf32>
    %248 = math.exp %247 : vector<2x128xf32>
    %cst_89 = arith.constant 1.000000e+00 : f32
    %249 = vector.broadcast %cst_89 : f32 to vector<2x128xf32>
    %250 = arith.addf %249, %248 : vector<2x128xf32>
    %251 = arith.divf %249, %250 : vector<2x128xf32>
    %252 = vector.extract_strided_slice %251 {offsets = [0, 0], sizes = [2, 64], strides = [1, 1]} : vector<2x128xf32> to vector<2x64xf32>
    %253 = vector.extract_strided_slice %251 {offsets = [0, 64], sizes = [2, 64], strides = [1, 1]} : vector<2x128xf32> to vector<2x64xf32>
    %254 = vector.extract_strided_slice %240 {offsets = [0, 128], sizes = [2, 64], strides = [1, 1]} : vector<2x192xf32> to vector<2x64xf32>
    %255 = vector.extract_strided_slice %243 {offsets = [0, 128], sizes = [2, 64], strides = [1, 1]} : vector<2x192xf32> to vector<2x64xf32>
    %256 = arith.mulf %252, %255 : vector<2x64xf32>
    %257 = arith.addf %254, %256 : vector<2x64xf32>
    %258 = math.tanh %257 : vector<2x64xf32>
    %259 = arith.subf %233, %258 : vector<2x64xf32>
    %260 = arith.mulf %253, %259 : vector<2x64xf32>
    %261 = arith.addf %258, %260 : vector<2x64xf32>
    %262 = vector.extract_strided_slice %261 {offsets = [0, 0], sizes = [2, 32], strides = [1, 1]} : vector<2x64xf32> to vector<2x32xf32>
    %c14_90 = arith.constant 14 : index
    %c0_91 = arith.constant 0 : index
    %263 = vector.load %arg6[%c14_90, %c0_91] : memref<16x32xf32, #tpu.memory_space<vmem>>, vector<2x32xf32>
    tpu.vector_store %arg6[%c14_90, %c0_91], %262 {strides = array<i32>} : memref<16x32xf32, #tpu.memory_space<vmem>>, vector<2x32xf32>,
    %264 = vector.extract_strided_slice %261 {offsets = [0, 32], sizes = [2, 32], strides = [1, 1]} : vector<2x64xf32> to vector<2x32xf32>
    %c0_92 = arith.constant 0 : index
    %c0_93 = arith.constant 0 : index
    %265 = vector.load %arg7[%c0_92, %c0_93] : memref<16x32xf32, #tpu.memory_space<vmem>>, vector<2x32xf32>
    tpu.vector_store %arg7[%c0_92, %c0_93], %264 {strides = array<i32>} : memref<16x32xf32, #tpu.memory_space<vmem>>, vector<2x32xf32>,
    %c0_94 = arith.constant 0 : index
    %c0_95 = arith.constant 0 : index
    %266 = vector.load %arg6[%c0_94, %c0_95] : memref<16x32xf32, #tpu.memory_space<vmem>>, vector<16x32xf32>
    %c0_96 = arith.constant 0 : index
    %c0_97 = arith.constant 0 : index
    %267 = vector.load %arg7[%c0_96, %c0_97] : memref<16x32xf32, #tpu.memory_space<vmem>>, vector<16x32xf32>
    %268 = arith.addf %266, %267 : vector<16x32xf32>
    %c0_98 = arith.constant 0 : index
    %c0_99 = arith.constant 0 : index
    %269 = vector.load %arg3[%c0_98, %c0_99] : memref<16x32xf32, #tpu.memory_space<vmem>>, vector<16x32xf32>
    tpu.vector_store %arg3[%c0_98, %c0_99], %268 {strides = array<i32>} : memref<16x32xf32, #tpu.memory_space<vmem>>, vector<16x32xf32>,
    %270 = vector.extract_strided_slice %261 {offsets = [0, 0], sizes = [2, 32], strides = [1, 1]} : vector<2x64xf32> to vector<2x32xf32>
    %c0_100 = arith.constant 0 : index
    %c0_101 = arith.constant 0 : index
    %c0_102 = arith.constant 0 : index
    %271 = vector.load %arg4[%c0_100, %c0_101, %c0_102] : memref<2x2x32xf32, #tpu.memory_space<vmem>>, vector<1x2x32xf32>
    %272 = vector.shape_cast %271 : vector<1x2x32xf32> to vector<2x32xf32>
    %273 = vector.shape_cast %270 : vector<2x32xf32> to vector<1x2x32xf32>
    tpu.vector_store %arg4[%c0_100, %c0_101, %c0_102], %273 {strides = array<i32>} : memref<2x2x32xf32, #tpu.memory_space<vmem>>, vector<1x2x32xf32>,
    %274 = vector.extract_strided_slice %261 {offsets = [0, 32], sizes = [2, 32], strides = [1, 1]} : vector<2x64xf32> to vector<2x32xf32>
    %c1 = arith.constant 1 : index
    %c0_103 = arith.constant 0 : index
    %c0_104 = arith.constant 0 : index
    %275 = vector.load %arg4[%c1, %c0_103, %c0_104] : memref<2x2x32xf32, #tpu.memory_space<vmem>>, vector<1x2x32xf32>
    %276 = vector.shape_cast %275 : vector<1x2x32xf32> to vector<2x32xf32>
    %277 = vector.shape_cast %274 : vector<2x32xf32> to vector<1x2x32xf32>
    tpu.vector_store %arg4[%c1, %c0_103, %c0_104], %277 {strides = array<i32>} : memref<2x2x32xf32, #tpu.memory_space<vmem>>, vector<1x2x32xf32>,
    return
  }
}

</mosaic_0001>

<llo_original>
// kernel: forward.1
$region0: #{forward.1}
  #allocation0 [shape = 'u32[]', space=smem, size = 0x4, offset = 0x4, fixed_abs, tag = 'smem constant byte address 0x4 - core index']
  #allocation1 [shape = 'u32[72,128]{1,0:T(1,128)}', space=vmem, size = 0x9000, scoped, tag = 'internal scratch']
  #allocation2 [shape = 'f32[16,192]{1,0:T(8,128)}', space=vmem, size = 0x4000, scoped, tag = 'scratch operand']
  #allocation3 [shape = 'f32[16,32]{1,0:T(8,128)}', space=vmem, size = 0x2000, scoped, tag = 'scratch operand']
  #allocation4 [shape = 'f32[16,32]{1,0:T(8,128)}', space=vmem, size = 0x2000, scoped, tag = 'scratch operand']
  %s0 = inlined_call_operand.hbm [shape: f32[2,8], index: 0, kind: input, shape index: {}]
  %s1 = inlined_call_operand.hbm [shape: f32[16,16], index: 1, kind: input, shape index: {}]
  %s2 = inlined_call_operand.hbm [shape: f32[192,192], index: 2, kind: input, shape index: {}]
  %s3 = inlined_call_operand.hbm [shape: f32[16,32], index: 3, kind: output, shape index: {0}]
  %s4 = inlined_call_operand.hbm [shape: f32[2,2,32], index: 4, kind: output, shape index: {1}]
  %5 = xla_tuple %s3, %s4
  %s6 = sld [smem:[#allocation0]]
  $region42: #{forward.1} parent=0
    _
  %s8 = ssub.s32 1, %s6
  %s9 = scalar_select 0, %s8, %s6
  $region1: #{forward.1} parent=0
    #allocation5 [shape = 'u8[1024]{0}', space=vmem, size = 0x400, scoped, tag = 'input window, operand 0, single buffered']
    #allocation6 [shape = 's32[1]{0}', space=sflag, size = 0x4, scoped, tag = 'scoped memory for forward.1']
    #allocation7 [shape = 's32[1]{0}', space=sflag, size = 0x4, scoped, tag = 'scoped memory for forward.1']
    #allocation8 [shape = 'u8[8192]{0}', space=vmem, size = 0x2000, scoped, tag = 'input window, operand 1, single buffered']
    #allocation9 [shape = 's32[1]{0}', space=sflag, size = 0x4, scoped, tag = 'scoped memory for forward.1']
    #allocation10 [shape = 'u8[196608]{0}', space=vmem, size = 0x30000, scoped, tag = 'input window, operand 2, single buffered']
    #allocation11 [shape = 'u8[8192]{0}', space=vmem, size = 0x2000, scoped, tag = 'output window, operand 0, single buffered']
    #allocation12 [shape = 'u8[2048]{0}', space=vmem, size = 0x800, scoped, tag = 'output window, operand 1, single buffered']
    #allocation13 [shape = 's32[1]{0}', space=sflag, size = 0x4, scoped, tag = 'scoped memory for forward.1']
    %10 = vsyncpa [#allocation6], 0
    %11 = vsyncpa [#allocation9], 0
    %12 = vsyncpa [#allocation7], 0
    %13 = vsyncpa [#allocation13], 0
    // Predicated region
    $region2: #{forward.1} parent=1 // pred_check
      _
    $region3: #{forward.1} parent=1 // pred_check_branch
      %15 = sbr.rel (0) target = $region5
    $region4: #{forward.1} parent=1 // pred_region
      %17 = vsyncadd [#allocation6], 0
      %s19 = sshll.u32 %s0, 4
      %s20 = int_to_ptr.hbm [resolvable:$true] %s19
      %s21 = sshll.u32 [#allocation5], 4
      %s22 = int_to_ptr.vmem [resolvable:$true] %s21
      %24 = dma.hbm_to_vmem [thread:$0]  %s20, 32, %s22, [#allocation6]
    $region5: #{forward.1} parent=1 // pred_fallthru
      _
    // Predicated region
    $region6: #{forward.1} parent=1 // pred_check
      _
    $region7: #{forward.1} parent=1 // pred_check_branch
      %26 = sbr.rel (0) target = $region9
    $region8: #{forward.1} parent=1 // pred_region
      %28 = vsyncadd [#allocation9], 0
      %s29 = sshll.u32 %s1, 4
      %s30 = int_to_ptr.hbm [resolvable:$true] %s29
      %s31 = sshll.u32 [#allocation8], 4
      %s32 = int_to_ptr.vmem [resolvable:$true] %s31
      %37 = dma.hbm_to_vmem [thread:$0]  %s30, 256, %s32, [#allocation9], 128, 128, 8
    $region9: #{forward.1} parent=1 // pred_fallthru
      _
    // Predicated region
    $region10: #{forward.1} parent=1 // pred_check
      _
    $region11: #{forward.1} parent=1 // pred_check_branch
      %39 = sbr.rel (0) target = $region13
    $region12: #{forward.1} parent=1 // pred_region
      %41 = vsyncadd [#allocation9], 0
      %s42 = sshll.u32 %s2, 4
      %s43 = int_to_ptr.hbm [resolvable:$true] %s42
      %s44 = sshll.u32 [#allocation10], 4
      %s45 = int_to_ptr.vmem [resolvable:$true] %s44
      %50 = dma.hbm_to_vmem [thread:$0]  %s43, 6144, %s45, [#allocation9], 256, 256, 16
    $region13: #{forward.1} parent=1 // pred_fallthru
      _
    // Predicated region
    $region14: #{forward.1} parent=1 // pred_check
      _
    $region15: #{forward.1} parent=1 // pred_check_branch
      %52 = sbr.rel (0) target = $region17
    $region16: #{forward.1} parent=1 // pred_region
      %54 = dma.done [#allocation6], 32
    $region17: #{forward.1} parent=1 // pred_fallthru
      _
    // Predicated region
    $region18: #{forward.1} parent=1 // pred_check
      _
    $region19: #{forward.1} parent=1 // pred_check_branch
      %56 = sbr.rel (0) target = $region21
    $region20: #{forward.1} parent=1 // pred_region
      %58 = dma.done [#allocation9], 256
    $region21: #{forward.1} parent=1 // pred_fallthru
      _
    // Predicated region
    $region22: #{forward.1} parent=1 // pred_check
      _
    $region23: #{forward.1} parent=1 // pred_check_branch
      %60 = sbr.rel (0) target = $region25
    $region24: #{forward.1} parent=1 // pred_region
      %62 = dma.done [#allocation9], 6144
    $region25: #{forward.1} parent=1 // pred_fallthru
      _
    %v63 = vld [vmem:[#allocation10] sm:$0xff]
    %v64 = vld [vmem:[#allocation10 + $0x10] sm:$0xff]
    %v65 = vld [vmem:[#allocation10 + $0x20] sm:$0xff]
    %v66 = vld [vmem:[#allocation10 + $0x30] sm:$0xff]
    %v67 = vld [vmem:[#allocation10 + $0x40] sm:$0xff]
    %v68 = vld [vmem:[#allocation10 + $0x50] sm:$0xff]
    %v69 = vld [vmem:[#allocation10 + $0x60] sm:$0xff]
    %v70 = vld [vmem:[#allocation10 + $0x70] sm:$0xff]
    %v71 = vld [vmem:[#allocation10 + $0x80] sm:$0xff]
    %v72 = vld [vmem:[#allocation10 + $0x90] sm:$0xff]
    %v73 = vld [vmem:[#allocation10 + $0xa0] sm:$0xff]
    %v74 = vld [vmem:[#allocation10 + $0xb0] sm:$0xff]
    %v75 = vld [vmem:[#allocation10 + $0xc0] sm:$0xff]
    %v76 = vld [vmem:[#allocation10 + $0xd0] sm:$0xff]
    %v77 = vld [vmem:[#allocation10 + $0xd8] sm:$0xff]
    %v78 = vld [vmem:[#allocation10 + $0xe0] sm:$0xff]
    %v79 = vld [vmem:[#allocation10 + $0xe8] sm:$0xff]
    %v80 = vld [vmem:[#allocation10 + $0xf0] sm:$0xff]
    %v81 = vld [vmem:[#allocation10 + $0xf8] sm:$0xff]
    %v82 = vld [vmem:[#allocation10 + $0x100] sm:$0xff]
    %v83 = vld [vmem:[#allocation10 + $0x108] sm:$0xff]
    %v84 = vld [vmem:[#allocation10 + $0x110] sm:$0xff]
    %v85 = vld [vmem:[#allocation10 + $0x118] sm:$0xff]
    %v86 = vld [vmem:[#allocation10 + $0x120] sm:$0xff]
    %v87 = vld [vmem:[#allocation10 + $0x128] sm:$0xff]
    %v88 = vld [vmem:[#allocation10 + $0x130] sm:$0xff]
    %v89 = vld [vmem:[#allocation10 + $0x138] sm:$0xff]
    %v90 = vld [vmem:[#allocation10 + $0x140] sm:$0xff]
    %v91 = vld [vmem:[#allocation10 + $0x148] sm:$0xff]
    %v92 = vld [vmem:[#allocation10 + $0x150] sm:$0xff]
    %v93 = vld [vmem:[#allocation10 + $0x158] sm:$0xff]
    %v94 = vld [vmem:[#allocation10 + $0x160] sm:$0xff]
    %v95 = vld [vmem:[#allocation10 + $0x168] sm:$0xff]
    %v96 = vld [vmem:[#allocation10 + $0x170] ss:$0 sm:$0xff]
    %v97 = vld [vmem:[#allocation10 + $0x171] ss:$0 sm:$0xff]
    %s98 = scalar_lea.vmem [#allocation10], 370
    %v99 = vld [vmem:[%s98] ss:$8 sm:$0x3]
    %s100 = scalar_lea.vmem [#allocation10], 371
    %v101 = vld [vmem:[%s100] ss:$8 sm:$0x3]
    %v102 = vld [vmem:[#allocation5] sm:$0x3]
    %vm103 = vcmask 64512
    %v105 = vsel %vm103, %v102, 0
    %107 = vmatpush.msra.mxu0 0.0
    %108 = vmatpush.msra.mxu0 0.0
    %109 = vmatpush.msra.mxu0 0.0
    %110 = vmatpush.msra.mxu0 0.0
    %111 = vmatpush.msra.mxu0 0.0
    %112 = vmatpush.msra.mxu0 0.0
    %113 = vmatpush.msra.mxu0 0.0
    %114 = vmatpush.msra.mxu0 0.0
    %115 = vmatpush.msra.mxu0 0.0
    %116 = vmatpush.msra.mxu0 0.0
    %117 = vmatpush.msra.mxu0 0.0
    %118 = vmatpush.msra.mxu0 0.0
    %119 = vmatpush.msra.mxu0 0.0
    %120 = vmatpush.msra.mxu0 0.0
    %121 = vmatpush.msra.mxu0 0.0
    %122 = vmatpush.msra.mxu0 %v63
    %123 = vmatmul.f32.gmra.mxu0 %v105
    %v124 = vpop.f32.mrf.mxu0
    %v125 = vadd.f32 %v96, %v124
    %126 = vdwg.mxu0
    %v127 = vmax.f32 %v125, 0.0
    %vm128 = vcmask 785408
    %v130 = vsel %vm128, %v127, 0
    %132 = vmatpush.msra.mxu0 0.0
    %133 = vmatpush.msra.mxu0 0.0
    %134 = vmatpush.msra.mxu0 0.0
    %135 = vmatpush.msra.mxu0 0.0
    %136 = vmatpush.msra.mxu0 %v75
    %137 = vmatpush.msra.mxu0 %v74
    %138 = vmatpush.msra.mxu0 %v73
    %139 = vmatpush.msra.mxu0 %v72
    %140 = vmatpush.msra.mxu0 %v71
    %141 = vmatpush.msra.mxu0 %v70
    %142 = vmatpush.msra.mxu0 %v69
    %143 = vmatpush.msra.mxu0 %v68
    %144 = vmatpush.msra.mxu0 %v67
    %145 = vmatpush.msra.mxu0 %v66
    %146 = vmatpush.msra.mxu0 %v65
    %147 = vmatpush.msra.mxu0 %v64
    %148 = vmatmul.f32.gmra.mxu0 %v130
    %v149 = vpop.f32.mrf.mxu0
    %v150 = vadd.f32 %v97, %v149
    %151 = vdwg.mxu0
    %153 = vrot.lane.b32.xlu0 %v150, 32
    %v154 = vpop.permute.xlu0 %153
    %vm156 = vcmask 261120
    %v157 = vsel %vm156, %v150, %v154
    %v158 = vld [vmem:[#allocation8] sm:$0xff]
    %v159 = vld [vmem:[#allocation8 + $0x8] sm:$0xff]
    %v161 = vperm.slane %v99, 0
    %v162 = vperm.slane %v99, 1
    %vm165 = vcmask 130048
    %v167 = vsel %vm165, %v158, 0
    %v170 = vsel %vm165, %v159, 0
    %172 = vmatpush.msra.mxu0 0.0
    %173 = vmatpush.msra.mxu0 0.0
    %174 = vmatpush.msra.mxu0 0.0
    %175 = vmatpush.msra.mxu0 0.0
    %176 = vmatpush.msra.mxu0 0.0
    %177 = vmatpush.msra.mxu0 0.0
    %178 = vmatpush.msra.mxu0 0.0
    %179 = vmatpush.msra.mxu0 0.0
    %180 = vmatpush.msra.mxu0 0.0
    %181 = vmatpush.msra.mxu0 0.0
    %182 = vmatpush.msra.mxu0 0.0
    %183 = vmatpush.msra.mxu0 0.0
    %184 = vmatpush.msra.mxu0 0.0
    %185 = vmatpush.msra.mxu0 0.0
    %186 = vmatpush.msra.mxu0 %v78
    %187 = vmatpush.msra.mxu0 %v76
    %188 = vmatmul.f32.gmra.mxu0 %v167
    %v189 = vpop.f32.mrf.mxu0
    %v190 = vadd.f32 %v161, %v189
    %191 = vmatmul.f32.gmra.mxu0 %v170
    %v192 = vpop.f32.mrf.mxu0
    %v193 = vadd.f32 %v161, %v192
    %194 = vdwg.mxu0
    %195 = vmatpush.msra.mxu0 0.0
    %196 = vmatpush.msra.mxu0 0.0
    %197 = vmatpush.msra.mxu0 0.0
    %198 = vmatpush.msra.mxu0 0.0
    %199 = vmatpush.msra.mxu0 0.0
    %200 = vmatpush.msra.mxu0 0.0
    %201 = vmatpush.msra.mxu0 0.0
    %202 = vmatpush.msra.mxu0 0.0
    %203 = vmatpush.msra.mxu0 0.0
    %204 = vmatpush.msra.mxu0 0.0
    %205 = vmatpush.msra.mxu0 0.0
    %206 = vmatpush.msra.mxu0 0.0
    %207 = vmatpush.msra.mxu0 0.0
    %208 = vmatpush.msra.mxu0 0.0
    %209 = vmatpush.msra.mxu0 %v79
    %210 = vmatpush.msra.mxu0 %v77
    %211 = vmatmul.f32.gmra.mxu0 %v167
    %v212 = vpop.f32.mrf.mxu0
    %v213 = vadd.f32 %v162, %v212
    %214 = vmatmul.f32.gmra.mxu0 %v170
    %v215 = vpop.f32.mrf.mxu0
    %v216 = vadd.f32 %v162, %v215
    %217 = vdwg.mxu0
    %218 = vst [vmem:[#allocation2] sm:$0xff] %v190
    %vm219 = vcmask 523264
    %220 = vst.msk [vmem:[#allocation2 + $0x8] sm:$0xff] %vm219, %v213
    %221 = vst [vmem:[#allocation2 + $0x10] sm:$0xff] %v193
    %222 = vst.msk [vmem:[#allocation2 + $0x18] sm:$0xff] %vm219, %v216
    %v223 = vlaneseq
    %v224 = vand.u32 %v223, 127
    %v225 = vadd.s32 %v224, 128
    %vm226 = vcmp.lt.s32.totalorder %v224, 0
    %v227 = vsub.s32 0, %v224
    %v228 = vsel %vm226, %v227, %v224
    %v229 = vshrl.u32 %v228, 6
    %v230 = vand.u32 %v228, 63
    %v231 = vsub.s32 0, %v230
    %v232 = vsel %vm226, %v231, %v230
    %vm233 = vcmp.lt.s32.totalorder %v225, 0
    %v234 = vsub.s32 0, %v225
    %v235 = vsel %vm233, %v234, %v225
    %v236 = vshrl.u32 %v235, 6
    %v237 = vand.u32 %v235, 63
    %v238 = vsub.s32 0, %v237
    %v239 = vsel %vm233, %v238, %v237
    %vm240 = vcmp.ne.s32.totalorder %v232, 0
    %vm241 = vcmp.ne.s32.totalorder %v239, 0
    %vm242 = vcmp.lt.s32.totalorder %v232, 0
    %vm243 = vcmp.lt.s32.totalorder %v239, 0
    %vm244 = vmand %vm242, %vm240
    %vm245 = vmand %vm243, %vm241
    %v246 = vadd.s32 %v232, 64
    %v247 = vadd.s32 %v239, 64
    %v248 = vsel %vm244, %v246, %v232
    %v249 = vsel %vm245, %v247, %v239
    %vm250 = vcmp.lt.s32.totalorder %v248, 32
    %vm251 = vcmp.lt.s32.totalorder %v249, 32
    %v252 = vld [vmem:[#allocation2] sm:$0x3]
    %v253 = vld [vmem:[#allocation2 + $0x8] sm:$0x3]
    %v254 = vld [vmem:[#allocation2 + $0x10] sm:$0xc0]
    %v255 = vld [vmem:[#allocation2 + $0x18] sm:$0xc0]
    %v258 = vrot.slane %v254, 6
    %v259 = vrot.slane %v255, 6
    %v262 = vsel %vm250, %v252, %v258
    %v263 = vsel %vm251, %v253, %v259
    %v265 = vperm.slane %v101, 0
    %v266 = vperm.slane %v101, 1
    %v270 = vsel %vm219, %v157, 0
    %272 = vmatpush.msra.mxu0 0.0
    %273 = vmatpush.msra.mxu0 0.0
    %274 = vmatpush.msra.mxu0 0.0
    %275 = vmatpush.msra.mxu0 0.0
    %276 = vmatpush.msra.mxu0 0.0
    %277 = vmatpush.msra.mxu0 0.0
    %278 = vmatpush.msra.mxu0 0.0
    %279 = vmatpush.msra.mxu0 0.0
    %280 = vmatpush.msra.mxu0 %v94
    %281 = vmatpush.msra.mxu0 %v92
    %282 = vmatpush.msra.mxu0 %v90
    %283 = vmatpush.msra.mxu0 %v88
    %284 = vmatpush.msra.mxu0 %v86
    %285 = vmatpush.msra.mxu0 %v84
    %286 = vmatpush.msra.mxu0 %v82
    %287 = vmatpush.msra.mxu0 %v80
    %288 = vmatmul.f32.gmra.mxu0 %v270
    %v289 = vpop.f32.mrf.mxu0
    %v290 = vadd.f32 %v265, %v289
    %291 = vdwg.mxu0
    %292 = vmatpush.msra.mxu0 0.0
    %293 = vmatpush.msra.mxu0 0.0
    %294 = vmatpush.msra.mxu0 0.0
    %295 = vmatpush.msra.mxu0 0.0
    %296 = vmatpush.msra.mxu0 0.0
    %297 = vmatpush.msra.mxu0 0.0
    %298 = vmatpush.msra.mxu0 0.0
    %299 = vmatpush.msra.mxu0 0.0
    %300 = vmatpush.msra.mxu0 %v95
    %301 = vmatpush.msra.mxu0 %v93
    %302 = vmatpush.msra.mxu0 %v91
    %303 = vmatpush.msra.mxu0 %v89
    %304 = vmatpush.msra.mxu0 %v87
    %305 = vmatpush.msra.mxu0 %v85
    %306 = vmatpush.msra.mxu0 %v83
    %307 = vmatpush.msra.mxu0 %v81
    %308 = vmatmul.f32.gmra.mxu0 %v270
    %v309 = vpop.f32.mrf.mxu0
    %v310 = vadd.f32 %v266, %v309
    %311 = vdwg.mxu0
    %v312 = vadd.f32 %v262, %v290
    %v313 = vxor.u32 %v312, 2147483648
    %v314 = vmul.f32 %v313, 1.442695
    %v315 = vpow.pop %v314
    %v316 = vadd.f32 %v315, 1.0
    %v317 = vrcp.pop %v316
    %v318 = vmul.f32 %v316, %v317
    %v319 = vsub.f32 1.0, %v318
    %v320 = vmul.f32 %v317, %v319
    %v321 = vadd.f32 %v317, %v320
    %vm322 = vweird.f32 %v316
    %vm323 = vweird.f32 %v317
    %vm324 = vmor %vm322, %vm323
    %v325 = vsel %vm324, %v317, %v321
    %v326 = vand.u32 2147483647, %v316
    %vm327 = vcmp.eq.f32.partialorder %v326, 8.507059e+37
    %v328 = vand.u32 %v316, 2147483648
    %v329 = vor.u32 1.1754944e-38, %v328
    %v330 = vsel %vm327, %v329, %v325
    %v331 = vmul.f32 1.0, %v330
    %v332 = vmul.f32 %v331, %v310
    %v333 = vadd.f32 %v263, %v332
    %v334 = vtanh.pop %v333
    %v335 = vsub.f32 %v157, %v334
    %337 = vrot.lane.b32.xlu0 %v335, 64
    %v338 = vpop.permute.xlu0 %337
    %v340 = vmul.f32 %v331, %v338
    %342 = vrot.lane.b32.xlu0 %v340, 64
    %v343 = vpop.permute.xlu0 %342
    %v345 = vadd.f32 %v334, %v343
    %vm346 = vcmask 254976
    %347 = vst.msk [vmem:[#allocation3] sm:$0x3] %vm346, %v345
    %349 = vrot.lane.b32.xlu0 %v345, 96
    %v350 = vpop.permute.xlu0 %349
    %352 = vst.msk [vmem:[#allocation4 + $0xe] sm:$0x3] %vm346, %v350
    %v353 = vld [vmem:[#allocation2] sm:$0xc]
    %v354 = vld [vmem:[#allocation2 + $0x8] sm:$0xc]
    %v355 = vld [vmem:[#allocation2 + $0x10] sm:$0x30]
    %v356 = vld [vmem:[#allocation2 + $0x18] sm:$0x30]
    %v359 = vrot.slane %v355, 2
    %v360 = vrot.slane %v356, 2
    %v363 = vsel %vm250, %v353, %v359
    %v364 = vsel %vm251, %v354, %v360
    %v365 = vsel %vm219, %v345, 0
    %367 = vmatpush.msra.mxu0 0.0
    %368 = vmatpush.msra.mxu0 0.0
    %369 = vmatpush.msra.mxu0 0.0
    %370 = vmatpush.msra.mxu0 0.0
    %371 = vmatpush.msra.mxu0 0.0
    %372 = vmatpush.msra.mxu0 0.0
    %373 = vmatpush.msra.mxu0 0.0
    %374 = vmatpush.msra.mxu0 0.0
    %375 = vmatpush.msra.mxu0 %v94
    %376 = vmatpush.msra.mxu0 %v92
    %377 = vmatpush.msra.mxu0 %v90
    %378 = vmatpush.msra.mxu0 %v88
    %379 = vmatpush.msra.mxu0 %v86
    %380 = vmatpush.msra.mxu0 %v84
    %381 = vmatpush.msra.mxu0 %v82
    %382 = vmatpush.msra.mxu0 %v80
    %383 = vmatmul.f32.gmra.mxu0 %v365
    %v384 = vpop.f32.mrf.mxu0
    %v385 = vadd.f32 %v265, %v384
    %386 = vdwg.mxu0
    %387 = vmatpush.msra.mxu0 0.0
    %388 = vmatpush.msra.mxu0 0.0
    %389 = vmatpush.msra.mxu0 0.0
    %390 = vmatpush.msra.mxu0 0.0
    %391 = vmatpush.msra.mxu0 0.0
    %392 = vmatpush.msra.mxu0 0.0
    %393 = vmatpush.msra.mxu0 0.0
    %394 = vmatpush.msra.mxu0 0.0
    %395 = vmatpush.msra.mxu0 %v95
    %396 = vmatpush.msra.mxu0 %v93
    %397 = vmatpush.msra.mxu0 %v91
    %398 = vmatpush.msra.mxu0 %v89
    %399 = vmatpush.msra.mxu0 %v87
    %400 = vmatpush.msra.mxu0 %v85
    %401 = vmatpush.msra.mxu0 %v83
    %402 = vmatpush.msra.mxu0 %v81
    %403 = vmatmul.f32.gmra.mxu0 %v365
    %v404 = vpop.f32.mrf.mxu0
    %v405 = vadd.f32 %v266, %v404
    %406 = vdwg.mxu0
    %v408 = vrot.slane %v385, 6
    %v410 = vadd.f32 %v363, %v408
    %v411 = vxor.u32 %v410, 2147483648
    %v412 = vmul.f32 %v411, 1.442695
    %v413 = vpow.pop %v412
    %v414 = vadd.f32 %v413, 1.0
    %v415 = vrcp.pop %v414
    %v416 = vmul.f32 %v414, %v415
    %v417 = vsub.f32 1.0, %v416
    %v418 = vmul.f32 %v415, %v417
    %v419 = vadd.f32 %v415, %v418
    %vm420 = vweird.f32 %v414
    %vm421 = vweird.f32 %v415
    %vm422 = vmor %vm420, %vm421
    %v423 = vsel %vm422, %v415, %v419
    %v424 = vand.u32 2147483647, %v414
    %vm425 = vcmp.eq.f32.partialorder %v424, 8.507059e+37
    %v426 = vand.u32 %v414, 2147483648
    %v427 = vor.u32 1.1754944e-38, %v426
    %v428 = vsel %vm425, %v427, %v423
    %v429 = vmul.f32 1.0, %v428
    %v431 = vrot.slane %v405, 6
    %v433 = vmul.f32 %v429, %v431
    %v434 = vadd.f32 %v364, %v433
    %v435 = vtanh.pop %v434
    %v437 = vrot.slane %v435, 2
    %v439 = vsub.f32 %v345, %v437
    %v441 = vrot.slane %v439, 6
    %442 = vrot.lane.b32.xlu0 %v441, 64
    %v443 = vpop.permute.xlu0 %442
    %v445 = vmul.f32 %v429, %v443
    %447 = vrot.lane.b32.xlu0 %v445, 64
    %v448 = vpop.permute.xlu0 %447
    %v450 = vadd.f32 %v435, %v448
    %vm451 = vcmask 257026
    %452 = vst.msk [vmem:[#allocation3] sm:$0xc] %vm451, %v450
    %454 = vrot.lane.b32.xlu0 %v450, 96
    %v455 = vpop.permute.xlu0 %454
    %457 = vst.msk [vmem:[#allocation4 + $0xa] sm:$0xc] %vm451, %v455
    %v458 = vld [vmem:[#allocation2] sm:$0x30]
    %v459 = vld [vmem:[#allocation2 + $0x8] sm:$0x30]
    %v460 = vld [vmem:[#allocation2 + $0x10] sm:$0xc]
    %v461 = vld [vmem:[#allocation2 + $0x18] sm:$0xc]
    %v464 = vrot.slane %v460, 6
    %v465 = vrot.slane %v461, 6
    %v468 = vsel %vm250, %v458, %v464
    %v469 = vsel %vm251, %v459, %v465
    %v470 = vrot.slane %v450, 2
    %v471 = vsel %vm219, %v470, 0
    %473 = vmatpush.msra.mxu0 0.0
    %474 = vmatpush.msra.mxu0 0.0
    %475 = vmatpush.msra.mxu0 0.0
    %476 = vmatpush.msra.mxu0 0.0
    %477 = vmatpush.msra.mxu0 0.0
    %478 = vmatpush.msra.mxu0 0.0
    %479 = vmatpush.msra.mxu0 0.0
    %480 = vmatpush.msra.mxu0 0.0
    %481 = vmatpush.msra.mxu0 %v94
    %482 = vmatpush.msra.mxu0 %v92
    %483 = vmatpush.msra.mxu0 %v90
    %484 = vmatpush.msra.mxu0 %v88
    %485 = vmatpush.msra.mxu0 %v86
    %486 = vmatpush.msra.mxu0 %v84
    %487 = vmatpush.msra.mxu0 %v82
    %488 = vmatpush.msra.mxu0 %v80
    %489 = vmatmul.f32.gmra.mxu0 %v471
    %v490 = vpop.f32.mrf.mxu0
    %v491 = vadd.f32 %v265, %v490
    %492 = vdwg.mxu0
    %493 = vmatpush.msra.mxu0 0.0
    %494 = vmatpush.msra.mxu0 0.0
    %495 = vmatpush.msra.mxu0 0.0
    %496 = vmatpush.msra.mxu0 0.0
    %497 = vmatpush.msra.mxu0 0.0
    %498 = vmatpush.msra.mxu0 0.0
    %499 = vmatpush.msra.mxu0 0.0
    %500 = vmatpush.msra.mxu0 0.0
    %501 = vmatpush.msra.mxu0 %v95
    %502 = vmatpush.msra.mxu0 %v93
    %503 = vmatpush.msra.mxu0 %v91
    %504 = vmatpush.msra.mxu0 %v89
    %505 = vmatpush.msra.mxu0 %v87
    %506 = vmatpush.msra.mxu0 %v85
    %507 = vmatpush.msra.mxu0 %v83
    %508 = vmatpush.msra.mxu0 %v81
    %509 = vmatmul.f32.gmra.mxu0 %v471
    %v510 = vpop.f32.mrf.mxu0
    %v511 = vadd.f32 %v266, %v510
    %512 = vdwg.mxu0
    %v514 = vrot.slane %v491, 4
    %v516 = vadd.f32 %v468, %v514
    %v517 = vxor.u32 %v516, 2147483648
    %v518 = vmul.f32 %v517, 1.442695
    %v519 = vpow.pop %v518
    %v520 = vadd.f32 %v519, 1.0
    %v521 = vrcp.pop %v520
    %v522 = vmul.f32 %v520, %v521
    %v523 = vsub.f32 1.0, %v522
    %v524 = vmul.f32 %v521, %v523
    %v525 = vadd.f32 %v521, %v524
    %vm526 = vweird.f32 %v520
    %vm527 = vweird.f32 %v521
    %vm528 = vmor %vm526, %vm527
    %v529 = vsel %vm528, %v521, %v525
    %v530 = vand.u32 2147483647, %v520
    %vm531 = vcmp.eq.f32.partialorder %v530, 8.507059e+37
    %v532 = vand.u32 %v520, 2147483648
    %v533 = vor.u32 1.1754944e-38, %v532
    %v534 = vsel %vm531, %v533, %v529
    %v535 = vmul.f32 1.0, %v534
    %v537 = vrot.slane %v511, 4
    %v539 = vmul.f32 %v535, %v537
    %v540 = vadd.f32 %v469, %v539
    %v541 = vtanh.pop %v540
    %v543 = vrot.slane %v541, 2
    %v545 = vsub.f32 %v450, %v543
    %v547 = vrot.slane %v545, 6
    %548 = vrot.lane.b32.xlu0 %v547, 64
    %v549 = vpop.permute.xlu0 %548
    %v551 = vmul.f32 %v535, %v549
    %553 = vrot.lane.b32.xlu0 %v551, 64
    %v554 = vpop.permute.xlu0 %553
    %v556 = vadd.f32 %v541, %v554
    %vm557 = vcmask 259076
    %558 = vst.msk [vmem:[#allocation3] sm:$0x30] %vm557, %v556
    %560 = vrot.lane.b32.xlu0 %v556, 96
    %v561 = vpop.permute.xlu0 %560
    %563 = vst.msk [vmem:[#allocation4 + $0x6] sm:$0x30] %vm557, %v561
    %v564 = vld [vmem:[#allocation2] sm:$0xc0]
    %v565 = vld [vmem:[#allocation2 + $0x8] sm:$0xc0]
    %v566 = vld [vmem:[#allocation2 + $0x10] sm:$0x3]
    %v567 = vld [vmem:[#allocation2 + $0x18] sm:$0x3]
    %v570 = vrot.slane %v566, 2
    %v571 = vrot.slane %v567, 2
    %v574 = vsel %vm250, %v564, %v570
    %v575 = vsel %vm251, %v565, %v571
    %v576 = vrot.slane %v556, 4
    %v577 = vsel %vm219, %v576, 0
    %579 = vmatpush.msra.mxu0 0.0
    %580 = vmatpush.msra.mxu0 0.0
    %581 = vmatpush.msra.mxu0 0.0
    %582 = vmatpush.msra.mxu0 0.0
    %583 = vmatpush.msra.mxu0 0.0
    %584 = vmatpush.msra.mxu0 0.0
    %585 = vmatpush.msra.mxu0 0.0
    %586 = vmatpush.msra.mxu0 0.0
    %587 = vmatpush.msra.mxu0 %v94
    %588 = vmatpush.msra.mxu0 %v92
    %589 = vmatpush.msra.mxu0 %v90
    %590 = vmatpush.msra.mxu0 %v88
    %591 = vmatpush.msra.mxu0 %v86
    %592 = vmatpush.msra.mxu0 %v84
    %593 = vmatpush.msra.mxu0 %v82
    %594 = vmatpush.msra.mxu0 %v80
    %595 = vmatmul.f32.gmra.mxu0 %v577
    %v596 = vpop.f32.mrf.mxu0
    %v597 = vadd.f32 %v265, %v596
    %598 = vdwg.mxu0
    %599 = vmatpush.msra.mxu0 0.0
    %600 = vmatpush.msra.mxu0 0.0
    %601 = vmatpush.msra.mxu0 0.0
    %602 = vmatpush.msra.mxu0 0.0
    %603 = vmatpush.msra.mxu0 0.0
    %604 = vmatpush.msra.mxu0 0.0
    %605 = vmatpush.msra.mxu0 0.0
    %606 = vmatpush.msra.mxu0 0.0
    %607 = vmatpush.msra.mxu0 %v95
    %608 = vmatpush.msra.mxu0 %v93
    %609 = vmatpush.msra.mxu0 %v91
    %610 = vmatpush.msra.mxu0 %v89
    %611 = vmatpush.msra.mxu0 %v87
    %612 = vmatpush.msra.mxu0 %v85
    %613 = vmatpush.msra.mxu0 %v83
    %614 = vmatpush.msra.mxu0 %v81
    %615 = vmatmul.f32.gmra.mxu0 %v577
    %v616 = vpop.f32.mrf.mxu0
    %v617 = vadd.f32 %v266, %v616
    %618 = vdwg.mxu0
    %v620 = vrot.slane %v597, 2
    %v622 = vadd.f32 %v574, %v620
    %v623 = vxor.u32 %v622, 2147483648
    %v624 = vmul.f32 %v623, 1.442695
    %v625 = vpow.pop %v624
    %v626 = vadd.f32 %v625, 1.0
    %v627 = vrcp.pop %v626
    %v628 = vmul.f32 %v626, %v627
    %v629 = vsub.f32 1.0, %v628
    %v630 = vmul.f32 %v627, %v629
    %v631 = vadd.f32 %v627, %v630
    %vm632 = vweird.f32 %v626
    %vm633 = vweird.f32 %v627
    %vm634 = vmor %vm632, %vm633
    %v635 = vsel %vm634, %v627, %v631
    %v636 = vand.u32 2147483647, %v626
    %vm637 = vcmp.eq.f32.partialorder %v636, 8.507059e+37
    %v638 = vand.u32 %v626, 2147483648
    %v639 = vor.u32 1.1754944e-38, %v638
    %v640 = vsel %vm637, %v639, %v635
    %v641 = vmul.f32 1.0, %v640
    %v643 = vrot.slane %v617, 2
    %v645 = vmul.f32 %v641, %v643
    %v646 = vadd.f32 %v575, %v645
    %v647 = vtanh.pop %v646
    %v649 = vrot.slane %v647, 2
    %v651 = vsub.f32 %v556, %v649
    %v653 = vrot.slane %v651, 6
    %654 = vrot.lane.b32.xlu0 %v653, 64
    %v655 = vpop.permute.xlu0 %654
    %v657 = vmul.f32 %v641, %v655
    %659 = vrot.lane.b32.xlu0 %v657, 64
    %v660 = vpop.permute.xlu0 %659
    %v662 = vadd.f32 %v647, %v660
    %vm663 = vcmask 261126
    %664 = vst.msk [vmem:[#allocation3] sm:$0xc0] %vm663, %v662
    %666 = vrot.lane.b32.xlu0 %v662, 96
    %v667 = vpop.permute.xlu0 %666
    %669 = vst.msk [vmem:[#allocation4 + $0x2] sm:$0xc0] %vm663, %v667
    %v670 = vld [vmem:[#allocation2 + $0x10] sm:$0x3]
    %v671 = vld [vmem:[#allocation2 + $0x18] sm:$0x3]
    %v672 = vld [vmem:[#allocation2] sm:$0xc0]
    %v673 = vld [vmem:[#allocation2 + $0x8] sm:$0xc0]
    %v676 = vrot.slane %v672, 6
    %v677 = vrot.slane %v673, 6
    %v680 = vsel %vm250, %v670, %v676
    %v681 = vsel %vm251, %v671, %v677
    %v682 = vrot.slane %v662, 6
    %v683 = vsel %vm219, %v682, 0
    %685 = vmatpush.msra.mxu0 0.0
    %686 = vmatpush.msra.mxu0 0.0
    %687 = vmatpush.msra.mxu0 0.0
    %688 = vmatpush.msra.mxu0 0.0
    %689 = vmatpush.msra.mxu0 0.0
    %690 = vmatpush.msra.mxu0 0.0
    %691 = vmatpush.msra.mxu0 0.0
    %692 = vmatpush.msra.mxu0 0.0
    %693 = vmatpush.msra.mxu0 %v94
    %694 = vmatpush.msra.mxu0 %v92
    %695 = vmatpush.msra.mxu0 %v90
    %696 = vmatpush.msra.mxu0 %v88
    %697 = vmatpush.msra.mxu0 %v86
    %698 = vmatpush.msra.mxu0 %v84
    %699 = vmatpush.msra.mxu0 %v82
    %700 = vmatpush.msra.mxu0 %v80
    %701 = vmatmul.f32.gmra.mxu0 %v683
    %v702 = vpop.f32.mrf.mxu0
    %v703 = vadd.f32 %v265, %v702
    %704 = vdwg.mxu0
    %705 = vmatpush.msra.mxu0 0.0
    %706 = vmatpush.msra.mxu0 0.0
    %707 = vmatpush.msra.mxu0 0.0
    %708 = vmatpush.msra.mxu0 0.0
    %709 = vmatpush.msra.mxu0 0.0
    %710 = vmatpush.msra.mxu0 0.0
    %711 = vmatpush.msra.mxu0 0.0
    %712 = vmatpush.msra.mxu0 0.0
    %713 = vmatpush.msra.mxu0 %v95
    %714 = vmatpush.msra.mxu0 %v93
    %715 = vmatpush.msra.mxu0 %v91
    %716 = vmatpush.msra.mxu0 %v89
    %717 = vmatpush.msra.mxu0 %v87
    %718 = vmatpush.msra.mxu0 %v85
    %719 = vmatpush.msra.mxu0 %v83
    %720 = vmatpush.msra.mxu0 %v81
    %721 = vmatmul.f32.gmra.mxu0 %v683
    %v722 = vpop.f32.mrf.mxu0
    %v723 = vadd.f32 %v266, %v722
    %724 = vdwg.mxu0
    %v725 = vadd.f32 %v680, %v703
    %v726 = vxor.u32 %v725, 2147483648
    %v727 = vmul.f32 %v726, 1.442695
    %v728 = vpow.pop %v727
    %v729 = vadd.f32 %v728, 1.0
    %v730 = vrcp.pop %v729
    %v731 = vmul.f32 %v729, %v730
    %v732 = vsub.f32 1.0, %v731
    %v733 = vmul.f32 %v730, %v732
    %v734 = vadd.f32 %v730, %v733
    %vm735 = vweird.f32 %v729
    %vm736 = vweird.f32 %v730
    %vm737 = vmor %vm735, %vm736
    %v738 = vsel %vm737, %v730, %v734
    %v739 = vand.u32 2147483647, %v729
    %vm740 = vcmp.eq.f32.partialorder %v739, 8.507059e+37
    %v741 = vand.u32 %v729, 2147483648
    %v742 = vor.u32 1.1754944e-38, %v741
    %v743 = vsel %vm740, %v742, %v738
    %v744 = vmul.f32 1.0, %v743
    %v745 = vmul.f32 %v744, %v723
    %v746 = vadd.f32 %v681, %v745
    %v747 = vtanh.pop %v746
    %v749 = vrot.slane %v747, 2
    %v751 = vsub.f32 %v662, %v749
    %v753 = vrot.slane %v751, 6
    %754 = vrot.lane.b32.xlu0 %v753, 64
    %v755 = vpop.permute.xlu0 %754
    %v757 = vmul.f32 %v744, %v755
    %759 = vrot.lane.b32.xlu0 %v757, 64
    %v760 = vpop.permute.xlu0 %759
    %v762 = vadd.f32 %v747, %v760
    %763 = vst.msk [vmem:[#allocation3 + $0x8] sm:$0x3] %vm346, %v762
    %765 = vrot.lane.b32.xlu0 %v762, 96
    %v766 = vpop.permute.xlu0 %765
    %768 = vst.msk [vmem:[#allocation4 + $0x6] sm:$0x3] %vm346, %v766
    %v769 = vld [vmem:[#allocation2 + $0x10] sm:$0xc]
    %v770 = vld [vmem:[#allocation2 + $0x18] sm:$0xc]
    %v771 = vld [vmem:[#allocation2] sm:$0x30]
    %v772 = vld [vmem:[#allocation2 + $0x8] sm:$0x30]
    %v775 = vrot.slane %v771, 2
    %v776 = vrot.slane %v772, 2
    %v779 = vsel %vm250, %v769, %v775
    %v780 = vsel %vm251, %v770, %v776
    %v781 = vsel %vm219, %v762, 0
    %783 = vmatpush.msra.mxu0 0.0
    %784 = vmatpush.msra.mxu0 0.0
    %785 = vmatpush.msra.mxu0 0.0
    %786 = vmatpush.msra.mxu0 0.0
    %787 = vmatpush.msra.mxu0 0.0
    %788 = vmatpush.msra.mxu0 0.0
    %789 = vmatpush.msra.mxu0 0.0
    %790 = vmatpush.msra.mxu0 0.0
    %791 = vmatpush.msra.mxu0 %v94
    %792 = vmatpush.msra.mxu0 %v92
    %793 = vmatpush.msra.mxu0 %v90
    %794 = vmatpush.msra.mxu0 %v88
    %795 = vmatpush.msra.mxu0 %v86
    %796 = vmatpush.msra.mxu0 %v84
    %797 = vmatpush.msra.mxu0 %v82
    %798 = vmatpush.msra.mxu0 %v80
    %799 = vmatmul.f32.gmra.mxu0 %v781
    %v800 = vpop.f32.mrf.mxu0
    %v801 = vadd.f32 %v265, %v800
    %802 = vdwg.mxu0
    %803 = vmatpush.msra.mxu0 0.0
    %804 = vmatpush.msra.mxu0 0.0
    %805 = vmatpush.msra.mxu0 0.0
    %806 = vmatpush.msra.mxu0 0.0
    %807 = vmatpush.msra.mxu0 0.0
    %808 = vmatpush.msra.mxu0 0.0
    %809 = vmatpush.msra.mxu0 0.0
    %810 = vmatpush.msra.mxu0 0.0
    %811 = vmatpush.msra.mxu0 %v95
    %812 = vmatpush.msra.mxu0 %v93
    %813 = vmatpush.msra.mxu0 %v91
    %814 = vmatpush.msra.mxu0 %v89
    %815 = vmatpush.msra.mxu0 %v87
    %816 = vmatpush.msra.mxu0 %v85
    %817 = vmatpush.msra.mxu0 %v83
    %818 = vmatpush.msra.mxu0 %v81
    %819 = vmatmul.f32.gmra.mxu0 %v781
    %v820 = vpop.f32.mrf.mxu0
    %v821 = vadd.f32 %v266, %v820
    %822 = vdwg.mxu0
    %v824 = vrot.slane %v801, 6
    %v826 = vadd.f32 %v779, %v824
    %v827 = vxor.u32 %v826, 2147483648
    %v828 = vmul.f32 %v827, 1.442695
    %v829 = vpow.pop %v828
    %v830 = vadd.f32 %v829, 1.0
    %v831 = vrcp.pop %v830
    %v832 = vmul.f32 %v830, %v831
    %v833 = vsub.f32 1.0, %v832
    %v834 = vmul.f32 %v831, %v833
    %v835 = vadd.f32 %v831, %v834
    %vm836 = vweird.f32 %v830
    %vm837 = vweird.f32 %v831
    %vm838 = vmor %vm836, %vm837
    %v839 = vsel %vm838, %v831, %v835
    %v840 = vand.u32 2147483647, %v830
    %vm841 = vcmp.eq.f32.partialorder %v840, 8.507059e+37
    %v842 = vand.u32 %v830, 2147483648
    %v843 = vor.u32 1.1754944e-38, %v842
    %v844 = vsel %vm841, %v843, %v839
    %v845 = vmul.f32 1.0, %v844
    %v847 = vrot.slane %v821, 6
    %v849 = vmul.f32 %v845, %v847
    %v850 = vadd.f32 %v780, %v849
    %v851 = vtanh.pop %v850
    %v853 = vrot.slane %v851, 2
    %v855 = vsub.f32 %v762, %v853
    %v857 = vrot.slane %v855, 6
    %858 = vrot.lane.b32.xlu0 %v857, 64
    %v859 = vpop.permute.xlu0 %858
    %v861 = vmul.f32 %v845, %v859
    %863 = vrot.lane.b32.xlu0 %v861, 64
    %v864 = vpop.permute.xlu0 %863
    %v866 = vadd.f32 %v851, %v864
    %867 = vst.msk [vmem:[#allocation3 + $0x8] sm:$0xc] %vm451, %v866
    %869 = vrot.lane.b32.xlu0 %v866, 96
    %v870 = vpop.permute.xlu0 %869
    %872 = vst.msk [vmem:[#allocation4 + $0x2] sm:$0xc] %vm451, %v870
    %v873 = vld [vmem:[#allocation2 + $0x10] sm:$0x30]
    %v874 = vld [vmem:[#allocation2 + $0x18] sm:$0x30]
    %v875 = vld [vmem:[#allocation2] sm:$0xc]
    %v876 = vld [vmem:[#allocation2 + $0x8] sm:$0xc]
    %v879 = vrot.slane %v875, 6
    %v880 = vrot.slane %v876, 6
    %v883 = vsel %vm250, %v873, %v879
    %v884 = vsel %vm251, %v874, %v880
    %v885 = vrot.slane %v866, 2
    %v886 = vsel %vm219, %v885, 0
    %888 = vmatpush.msra.mxu0 0.0
    %889 = vmatpush.msra.mxu0 0.0
    %890 = vmatpush.msra.mxu0 0.0
    %891 = vmatpush.msra.mxu0 0.0
    %892 = vmatpush.msra.mxu0 0.0
    %893 = vmatpush.msra.mxu0 0.0
    %894 = vmatpush.msra.mxu0 0.0
    %895 = vmatpush.msra.mxu0 0.0
    %896 = vmatpush.msra.mxu0 %v94
    %897 = vmatpush.msra.mxu0 %v92
    %898 = vmatpush.msra.mxu0 %v90
    %899 = vmatpush.msra.mxu0 %v88
    %900 = vmatpush.msra.mxu0 %v86
    %901 = vmatpush.msra.mxu0 %v84
    %902 = vmatpush.msra.mxu0 %v82
    %903 = vmatpush.msra.mxu0 %v80
    %904 = vmatmul.f32.gmra.mxu0 %v886
    %v905 = vpop.f32.mrf.mxu0
    %v906 = vadd.f32 %v265, %v905
    %907 = vdwg.mxu0
    %908 = vmatpush.msra.mxu0 0.0
    %909 = vmatpush.msra.mxu0 0.0
    %910 = vmatpush.msra.mxu0 0.0
    %911 = vmatpush.msra.mxu0 0.0
    %912 = vmatpush.msra.mxu0 0.0
    %913 = vmatpush.msra.mxu0 0.0
    %914 = vmatpush.msra.mxu0 0.0
    %915 = vmatpush.msra.mxu0 0.0
    %916 = vmatpush.msra.mxu0 %v95
    %917 = vmatpush.msra.mxu0 %v93
    %918 = vmatpush.msra.mxu0 %v91
    %919 = vmatpush.msra.mxu0 %v89
    %920 = vmatpush.msra.mxu0 %v87
    %921 = vmatpush.msra.mxu0 %v85
    %922 = vmatpush.msra.mxu0 %v83
    %923 = vmatpush.msra.mxu0 %v81
    %924 = vmatmul.f32.gmra.mxu0 %v886
    %v925 = vpop.f32.mrf.mxu0
    %v926 = vadd.f32 %v266, %v925
    %927 = vdwg.mxu0
    %v929 = vrot.slane %v906, 4
    %v931 = vadd.f32 %v883, %v929
    %v932 = vxor.u32 %v931, 2147483648
    %v933 = vmul.f32 %v932, 1.442695
    %v934 = vpow.pop %v933
    %v935 = vadd.f32 %v934, 1.0
    %v936 = vrcp.pop %v935
    %v937 = vmul.f32 %v935, %v936
    %v938 = vsub.f32 1.0, %v937
    %v939 = vmul.f32 %v936, %v938
    %v940 = vadd.f32 %v936, %v939
    %vm941 = vweird.f32 %v935
    %vm942 = vweird.f32 %v936
    %vm943 = vmor %vm941, %vm942
    %v944 = vsel %vm943, %v936, %v940
    %v945 = vand.u32 2147483647, %v935
    %vm946 = vcmp.eq.f32.partialorder %v945, 8.507059e+37
    %v947 = vand.u32 %v935, 2147483648
    %v948 = vor.u32 1.1754944e-38, %v947
    %v949 = vsel %vm946, %v948, %v944
    %v950 = vmul.f32 1.0, %v949
    %v952 = vrot.slane %v926, 4
    %v954 = vmul.f32 %v950, %v952
    %v955 = vadd.f32 %v884, %v954
    %v956 = vtanh.pop %v955
    %v958 = vrot.slane %v956, 2
    %v960 = vsub.f32 %v866, %v958
    %v962 = vrot.slane %v960, 6
    %963 = vrot.lane.b32.xlu0 %v962, 64
    %v964 = vpop.permute.xlu0 %963
    %v966 = vmul.f32 %v950, %v964
    %968 = vrot.lane.b32.xlu0 %v966, 64
    %v969 = vpop.permute.xlu0 %968
    %v971 = vadd.f32 %v956, %v969
    %972 = vst.msk [vmem:[#allocation3 + $0x8] sm:$0x30] %vm557, %v971
    %974 = vrot.lane.b32.xlu0 %v971, 96
    %v975 = vpop.permute.xlu0 %974
    %977 = vst.msk [vmem:[#allocation4 - $0x2] sm:$0x30] %vm557, %v975
    %v978 = vld [vmem:[#allocation2 + $0x10] sm:$0xc0]
    %v979 = vld [vmem:[#allocation2 + $0x18] sm:$0xc0]
    %v980 = vld [vmem:[#allocation2] sm:$0x3]
    %v981 = vld [vmem:[#allocation2 + $0x8] sm:$0x3]
    %v984 = vrot.slane %v980, 2
    %v985 = vrot.slane %v981, 2
    %v988 = vsel %vm250, %v978, %v984
    %v989 = vsel %vm251, %v979, %v985
    %v990 = vrot.slane %v971, 4
    %v991 = vsel %vm219, %v990, 0
    %993 = vmatpush.msra.mxu0 0.0
    %994 = vmatpush.msra.mxu0 0.0
    %995 = vmatpush.msra.mxu0 0.0
    %996 = vmatpush.msra.mxu0 0.0
    %997 = vmatpush.msra.mxu0 0.0
    %998 = vmatpush.msra.mxu0 0.0
    %999 = vmatpush.msra.mxu0 0.0
    %1000 = vmatpush.msra.mxu0 0.0
    %1001 = vmatpush.msra.mxu0 %v94
    %1002 = vmatpush.msra.mxu0 %v92
    %1003 = vmatpush.msra.mxu0 %v90
    %1004 = vmatpush.msra.mxu0 %v88
    %1005 = vmatpush.msra.mxu0 %v86
    %1006 = vmatpush.msra.mxu0 %v84
    %1007 = vmatpush.msra.mxu0 %v82
    %1008 = vmatpush.msra.mxu0 %v80
    %1009 = vmatmul.f32.gmra.mxu0 %v991
    %v1010 = vpop.f32.mrf.mxu0
    %v1011 = vadd.f32 %v265, %v1010
    %1012 = vdwg.mxu0
    %1013 = vmatpush.msra.mxu0 0.0
    %1014 = vmatpush.msra.mxu0 0.0
    %1015 = vmatpush.msra.mxu0 0.0
    %1016 = vmatpush.msra.mxu0 0.0
    %1017 = vmatpush.msra.mxu0 0.0
    %1018 = vmatpush.msra.mxu0 0.0
    %1019 = vmatpush.msra.mxu0 0.0
    %1020 = vmatpush.msra.mxu0 0.0
    %1021 = vmatpush.msra.mxu0 %v95
    %1022 = vmatpush.msra.mxu0 %v93
    %1023 = vmatpush.msra.mxu0 %v91
    %1024 = vmatpush.msra.mxu0 %v89
    %1025 = vmatpush.msra.mxu0 %v87
    %1026 = vmatpush.msra.mxu0 %v85
    %1027 = vmatpush.msra.mxu0 %v83
    %1028 = vmatpush.msra.mxu0 %v81
    %1029 = vmatmul.f32.gmra.mxu0 %v991
    %v1030 = vpop.f32.mrf.mxu0
    %v1031 = vadd.f32 %v266, %v1030
    %1032 = vdwg.mxu0
    %v1034 = vrot.slane %v1011, 2
    %v1036 = vadd.f32 %v988, %v1034
    %v1037 = vxor.u32 %v1036, 2147483648
    %v1038 = vmul.f32 %v1037, 1.442695
    %v1039 = vpow.pop %v1038
    %v1040 = vadd.f32 %v1039, 1.0
    %v1041 = vrcp.pop %v1040
    %v1042 = vmul.f32 %v1040, %v1041
    %v1043 = vsub.f32 1.0, %v1042
    %v1044 = vmul.f32 %v1041, %v1043
    %v1045 = vadd.f32 %v1041, %v1044
    %vm1046 = vweird.f32 %v1040
    %vm1047 = vweird.f32 %v1041
    %vm1048 = vmor %vm1046, %vm1047
    %v1049 = vsel %vm1048, %v1041, %v1045
    %v1050 = vand.u32 2147483647, %v1040
    %vm1051 = vcmp.eq.f32.partialorder %v1050, 8.507059e+37
    %v1052 = vand.u32 %v1040, 2147483648
    %v1053 = vor.u32 1.1754944e-38, %v1052
    %v1054 = vsel %vm1051, %v1053, %v1049
    %v1055 = vmul.f32 1.0, %v1054
    %v1057 = vrot.slane %v1031, 2
    %v1059 = vmul.f32 %v1055, %v1057
    %v1060 = vadd.f32 %v989, %v1059
    %v1061 = vtanh.pop %v1060
    %v1063 = vrot.slane %v1061, 2
    %v1065 = vsub.f32 %v971, %v1063
    %v1067 = vrot.slane %v1065, 6
    %1068 = vrot.lane.b32.xlu0 %v1067, 64
    %v1069 = vpop.permute.xlu0 %1068
    %v1071 = vmul.f32 %v1055, %v1069
    %1073 = vrot.lane.b32.xlu0 %v1071, 64
    %v1074 = vpop.permute.xlu0 %1073
    %v1076 = vadd.f32 %v1061, %v1074
    %1077 = vst.msk [vmem:[#allocation3 + $0x8] sm:$0xc0] %vm663, %v1076
    %1079 = vrot.lane.b32.xlu0 %v1076, 96
    %v1080 = vpop.permute.xlu0 %1079
    %1082 = vst.msk [vmem:[#allocation4 - $0x6] sm:$0xc0] %vm663, %v1080
    %v1083 = vld [vmem:[#allocation3] sm:$0xff]
    %v1084 = vld [vmem:[#allocation3 + $0x8] sm:$0xff]
    %v1085 = vld [vmem:[#allocation4] sm:$0xff]
    %v1086 = vld [vmem:[#allocation4 + $0x8] sm:$0xff]
    %v1087 = vadd.f32 %v1083, %v1085
    %v1088 = vadd.f32 %v1084, %v1086
    %1089 = vst.msk [vmem:[#allocation11] sm:$0xff] %vm156, %v1087
    %1090 = vst.msk [vmem:[#allocation11 + $0x8] sm:$0xff] %vm156, %v1088
    %1091 = vst.msk [vmem:[#allocation12 - $0x6] sm:$0xc0] %vm663, %v1076
    %s1092 = scalar_lea.vmem [#allocation12], 2
    %1093 = vst.msk [vmem:[%s1092 - $0x6] sm:$0xc0] %vm663, %v1080
    // Predicated region
    $region26: #{forward.1} parent=1 // pred_check
      _
    $region27: #{forward.1} parent=1 // pred_check_branch
      %1095 = sbr.rel (0) target = $region29
    $region28: #{forward.1} parent=1 // pred_region
      %1097 = vsyncadd [#allocation7], 0
      %s1098 = sshll.u32 [#allocation11], 4
      %s1099 = int_to_ptr.vmem [resolvable:$true] %s1098
      %s1100 = sshll.u32 %s3, 4
      %s1101 = int_to_ptr.hbm [resolvable:$true] %s1100
      %1106 = dma.vmem_to_hbm [thread:$0]  %s1099, 256, %s1101, [#allocation7], 128, 128, 8
    $region29: #{forward.1} parent=1 // pred_fallthru
      _
    // Predicated region
    $region30: #{forward.1} parent=1 // pred_check
      _
    $region31: #{forward.1} parent=1 // pred_check_branch
      %1108 = sbr.rel (0) target = $region33
    $region32: #{forward.1} parent=1 // pred_region
      %1110 = vsyncadd [#allocation13], 0
      %s1111 = sshll.u32 [#allocation12], 4
      %s1112 = int_to_ptr.vmem [resolvable:$true] %s1111
      %s1113 = sshll.u32 %s4, 4
      %s1114 = int_to_ptr.hbm [resolvable:$true] %s1113
      %1119 = dma.vmem_to_hbm [thread:$0]  %s1112, 64, %s1114, [#allocation13], 32, 32, 2
    $region33: #{forward.1} parent=1 // pred_fallthru
      _
    // Predicated region
    $region34: #{forward.1} parent=1 // pred_check
      _
    $region35: #{forward.1} parent=1 // pred_check_branch
      %1121 = sbr.rel (0) target = $region37
    $region36: #{forward.1} parent=1 // pred_region
      %1123 = dma.done [#allocation7], 256
    $region37: #{forward.1} parent=1 // pred_fallthru
      _
    // Predicated region
    $region38: #{forward.1} parent=1 // pred_check
      _
    $region39: #{forward.1} parent=1 // pred_check_branch
      %1125 = sbr.rel (0) target = $region41
    $region40: #{forward.1} parent=1 // pred_region
      %1127 = dma.done [#allocation13], 64
    $region41: #{forward.1} parent=1 // pred_fallthru
      _
    %1128 = vsyncpa [#allocation6], 1
    %1129 = vsyncpa [#allocation9], 1
    %1130 = vsyncpa [#allocation7], 1
    %1131 = vsyncpa [#allocation13], 1

</llo_original>
